<compile_context>
chip_gen: v7x
topology: tpu7x:2x2x1
jax: 0.10.0
libtpu: 0.0.40
codegen_flags: <defaults>
</compile_context>

<pallas_src>
import jax
import jax.numpy as jnp
from jax import lax
from jax.experimental import pallas as pl
from jax.experimental.pallas import tpu as pltpu

BN_EPS = 1e-5
_VMEM_LIMIT = 32 * 1024 * 1024


# ---------------------------------------------------------------------------
# Wrapper-side helpers: BN folding + space-to-depth layout (pure data movement)
# ---------------------------------------------------------------------------
def _bn_scale_bias(g, b, m, v):
    s = g / jnp.sqrt(v + BN_EPS)
    return s, (b - m * s).reshape(1, -1).astype(jnp.float32)


def _fold_1x1(w, g, b, m, v):
    """(cout,cin,1,1) conv + BN -> (cin,cout) bf16 weight, (1,cout) f32 bias."""
    s, bias = _bn_scale_bias(g, b, m, v)
    wf = (w[:, :, 0, 0].T * s[None, :]).astype(jnp.bfloat16)
    return wf, bias


def _fold_3x3_s1(w, g, b, m, v):
    """(cout,cin,3,3) conv + BN -> (9,cin,cout) bf16 per-tap weights, bias."""
    s, bias = _bn_scale_bias(g, b, m, v)
    cout, cin = w.shape[0], w.shape[1]
    wf = (jnp.transpose(w, (2, 3, 1, 0)) * s).reshape(9, cin, cout)
    return wf.astype(jnp.bfloat16), bias


def _fold_s2_conv(w, g, b, m, v):
    """Fold BN and rearrange a stride-2 KxK OIHW conv for a space-to-depth
    input: returns (kt*kt, 4*cin, cout) bf16 tap weights, kt = ceil(K/2)."""
    s, bias = _bn_scale_bias(g, b, m, v)
    cout, cin, k, _ = w.shape
    kt = (k + 1) // 2
    wp = jnp.zeros((cout, cin, 2 * kt, 2 * kt), w.dtype).at[:, :, :k, :k].set(w)
    wp = jnp.transpose(wp, (2, 3, 1, 0)) * s                 # (2kt,2kt,cin,cout)
    wp = wp.reshape(kt, 2, kt, 2, cin, cout).transpose(0, 2, 1, 3, 4, 5)
    return wp.reshape(kt * kt, 4 * cin, cout).astype(jnp.bfloat16), bias


def _space_to_depth2(x):
    """(N,H,W,C) -> (N,H/2,W/2,4C); channel order = (row parity, col parity, C)."""
    n, h, w, c = x.shape
    x = x.reshape(n, h // 2, 2, w // 2, 2, c).transpose(0, 1, 3, 2, 4, 5)
    return x.reshape(n, h // 2, w // 2, 4 * c)


def _phase_split2(x):
    """(N,H,W,C) -> (N,4,H/2,W/2,C); phase index = 2*row_parity + col_parity."""
    n, h, w, c = x.shape
    x = x.reshape(n, h // 2, 2, w // 2, 2, c).transpose(0, 2, 4, 1, 3, 5)
    return x.reshape(n, 4, h // 2, w // 2, c)


# ---------------------------------------------------------------------------
# Kernel 1: fully fused stride-1 ResNetBlock
# ---------------------------------------------------------------------------
def _block_s1_core(x_ref, w1_ref, b1_ref, w2_ref, b2_ref, w3_ref, b3_ref, pad_ref):
    _, H, W, c1 = x_ref.shape
    c2 = w1_ref.shape[1]

    x = x_ref[0]                                             # (H, W, c1) f32
    xf = x.reshape(H * W, c1)

    # cv1: 1x1 conv (BN folded) + SiLU   (bf16 MXU, f32 accumulate)
    t1 = jnp.dot(xf.astype(jnp.bfloat16), w1_ref[...],
                 preferred_element_type=jnp.float32) + b1_ref[...]
    t1 = t1 * jax.nn.sigmoid(t1)

    # zero-pad t1 by one pixel through a VMEM scratch (cv2's conv padding)
    pad_ref[...] = jnp.zeros_like(pad_ref)
    pad_ref[1:H + 1, 1:W + 1, :] = t1.reshape(H, W, c2)
    tp = pad_ref[...].astype(jnp.bfloat16)                   # (H+2, W+2, c2)

    # cv2: 3x3 / s1 conv = 9 shifted in-VMEM taps (no HBM im2col), f32 acc
    acc = jnp.zeros((H * W, c2), jnp.float32)
    for kh in range(3):
        for kw in range(3):
            tap = tp[kh:kh + H, kw:kw + W, :].reshape(H * W, c2)
            acc = acc + jnp.dot(tap, w2_ref[kh * 3 + kw],
                                preferred_element_type=jnp.float32)
    t2 = acc + b2_ref[...]
    t2 = t2 * jax.nn.sigmoid(t2)

    # cv3: 1x1 conv (BN folded), no activation
    z = jnp.dot(t2.astype(jnp.bfloat16), w3_ref[...],
                preferred_element_type=jnp.float32) + b3_ref[...]
    return z, xf


def _block_s1_proj_kernel(x_ref, w1_ref, b1_ref, w2_ref, b2_ref, w3_ref, b3_ref,
                          ws_ref, bs_ref, o_ref, pad_ref):
    z, xf = _block_s1_core(x_ref, w1_ref, b1_ref, w2_ref, b2_ref,
                           w3_ref, b3_ref, pad_ref)
    sc = jnp.dot(xf.astype(jnp.bfloat16), ws_ref[...],
                 preferred_element_type=jnp.float32) + bs_ref[...]
    o_ref[0] = jnp.maximum(z + sc, 0.0)


def _block_s1_id_kernel(x_ref, w1_ref, b1_ref, w2_ref, b2_ref, w3_ref, b3_ref,
                        o_ref, pad_ref):
    z, xf = _block_s1_core(x_ref, w1_ref, b1_ref, w2_ref, b2_ref,
                           w3_ref, b3_ref, pad_ref)
    o_ref[0] = jnp.maximum(z + xf, 0.0)


def _block_s1_call(x_nhwc, w1, b1, w2, b2, w3, b3, ws, bs):
    n, H, W, c1 = x_nhwc.shape
    c2 = w1.shape[1]
    c3 = w3.shape[1]
    P = H * W
    has_proj = ws is not None
    kernel = _block_s1_proj_kernel if has_proj else _block_s1_id_kernel

    in_specs = [
        pl.BlockSpec((1, H, W, c1), lambda i: (i, 0, 0, 0)),
        pl.BlockSpec((c1, c2), lambda i: (0, 0)),
        pl.BlockSpec((1, c2), lambda i: (0, 0)),
        pl.BlockSpec((9, c2, c2), lambda i: (0, 0, 0)),
        pl.BlockSpec((1, c2), lambda i: (0, 0)),
        pl.BlockSpec((c2, c3), lambda i: (0, 0)),
        pl.BlockSpec((1, c3), lambda i: (0, 0)),
    ]
    args = [x_nhwc, w1, b1, w2, b2, w3, b3]
    flops = 2 * n * P * (c1 * c2 + 9 * c2 * c2 + c2 * c3)
    if has_proj:
        in_specs += [pl.BlockSpec((c1, c3), lambda i: (0, 0)),
                     pl.BlockSpec((1, c3), lambda i: (0, 0))]
        args += [ws, bs]
        flops += 2 * n * P * c1 * c3
    bytes_accessed = 4 * n * P * (c1 + c3) + 2 * (c1 * c2 + 9 * c2 * c2 + c2 * c3)

    out = pl.pallas_call(
        kernel,
        out_shape=jax.ShapeDtypeStruct((n, P, c3), jnp.float32),
        grid=(n,),
        in_specs=in_specs,
        out_specs=pl.BlockSpec((1, P, c3), lambda i: (i, 0, 0)),
        scratch_shapes=[pltpu.VMEM((H + 2, W + 2, c2), jnp.float32)],
        compiler_params=pltpu.CompilerParams(
            dimension_semantics=("parallel",),
            vmem_limit_bytes=_VMEM_LIMIT),
        cost_estimate=pl.CostEstimate(flops=flops,
                                      transcendentals=2 * n * P * c2,
                                      bytes_accessed=bytes_accessed),
    )(*args)
    return out.reshape(n, H, W, c3)


# ---------------------------------------------------------------------------
# Kernel 2: 1x1 conv + BN + SiLU (row-tiled) — used as cv1 of stride-2 blocks
# ---------------------------------------------------------------------------
def _conv1x1_silu_kernel(x_ref, w_ref, b_ref, o_ref):
    z = jnp.dot(x_ref[0].astype(jnp.bfloat16), w_ref[...],
                preferred_element_type=jnp.float32) + b_ref[...]
    o_ref[0] = z * jax.nn.sigmoid(z)


def _conv1x1_silu_call(x_flat, w, b):
    n, P, cin = x_flat.shape
    cout = w.shape[1]
    tile = P
    for cand in (512, 256, 128, 64):                 # sublane-friendly P tiles
        if P % cand == 0:
            tile = cand
            break
    return pl.pallas_call(
        _conv1x1_silu_kernel,
        out_shape=jax.ShapeDtypeStruct((n, P, cout), jnp.float32),
        grid=(n, P // tile),
        in_specs=[pl.BlockSpec((1, tile, cin), lambda i, j: (i, j, 0)),
                  pl.BlockSpec((cin, cout), lambda i, j: (0, 0)),
                  pl.BlockSpec((1, cout), lambda i, j: (0, 0))],
        out_specs=pl.BlockSpec((1, tile, cout), lambda i, j: (i, j, 0)),
        compiler_params=pltpu.CompilerParams(
            dimension_semantics=("parallel", "parallel"),
            vmem_limit_bytes=_VMEM_LIMIT),
        cost_estimate=pl.CostEstimate(
            flops=2 * n * P * cin * cout,
            transcendentals=n * P * cout,
            bytes_accessed=4 * n * P * (cin + cout) + 2 * cin * cout),
    )(x_flat, w, b)


# ---------------------------------------------------------------------------
# Kernel 3: stride-2 conv (space-to-depth taps) + BN + SiLU — the 7x7 stem conv
# ---------------------------------------------------------------------------
def _make_s2d_conv_kernel(kt, Ho, Wo):
    taps = [(a, b) for a in range(kt) for b in range(kt)]

    def kernel(x_ref, w_ref, b_ref, o_ref):
        x = x_ref[0].astype(jnp.bfloat16)            # (Hh, Wh, 4*cin)
        cin4 = x.shape[-1]
        cout = w_ref.shape[-1]
        acc = jnp.zeros((Ho * Wo, cout), jnp.float32)
        for t, (a, b) in enumerate(taps):
            tap = x[a:a + Ho, b:b + Wo, :].reshape(Ho * Wo, cin4)
            acc = acc + jnp.dot(tap, w_ref[t], preferred_element_type=jnp.float32)
        z = acc + b_ref[...]
        o_ref[0] = z * jax.nn.sigmoid(z)

    return kernel


def _s2d_conv_bn_silu_call(xs2d, w, b, kt, Ho, Wo):
    n, Hh, Wh, cin4 = xs2d.shape
    cout = w.shape[-1]
    out = pl.pallas_call(
        _make_s2d_conv_kernel(kt, Ho, Wo),
        out_shape=jax.ShapeDtypeStruct((n, Ho * Wo, cout), jnp.float32),
        grid=(n,),
        in_specs=[pl.BlockSpec((1, Hh, Wh, cin4), lambda i: (i, 0, 0, 0)),
                  pl.BlockSpec((kt * kt, cin4, cout), lambda i: (0, 0, 0)),
                  pl.BlockSpec((1, cout), lambda i: (0, 0))],
        out_specs=pl.BlockSpec((1, Ho * Wo, cout), lambda i: (i, 0, 0)),
        compiler_params=pltpu.CompilerParams(
            dimension_semantics=("parallel",),
            vmem_limit_bytes=_VMEM_LIMIT),
        cost_estimate=pl.CostEstimate(
            flops=2 * n * Ho * Wo * kt * kt * cin4 * cout,
            transcendentals=n * Ho * Wo * cout,
            bytes_accessed=4 * xs2d.size + 4 * n * Ho * Wo * cout + 2 * w.size),
    )(xs2d, w, b)
    return out.reshape(n, Ho, Wo, cout)


# ---------------------------------------------------------------------------
# Kernel 4: fused stride-2 block tail: cv2(3x3,s2)+BN+SiLU -> cv3 -> +proj -> ReLU
# ---------------------------------------------------------------------------
def _make_block_s2_tail_kernel(Ho, Wo):
    taps = [(0, 0), (0, 1), (1, 0), (1, 1)]

    def kernel(t1_ref, xs_ref, w2_ref, b2_ref, w3_ref, b3_ref,
               ws_ref, bs_ref, o_ref):
        t1 = t1_ref[0].astype(jnp.bfloat16)          # (Hh, Wh, 4*c2)
        c24 = t1.shape[-1]
        c2 = w2_ref.shape[-1]
        acc = jnp.zeros((Ho * Wo, c2), jnp.float32)
        for t, (a, b) in enumerate(taps):
            tap = t1[a:a + Ho, b:b + Wo, :].reshape(Ho * Wo, c24)
            acc = acc + jnp.dot(tap, w2_ref[t], preferred_element_type=jnp.float32)
        t2 = acc + b2_ref[...]
        t2 = t2 * jax.nn.sigmoid(t2)

        z = jnp.dot(t2.astype(jnp.bfloat16), w3_ref[...],
                    preferred_element_type=jnp.float32) + b3_ref[...]

        c1 = xs_ref.shape[-1]
        xs = xs_ref[0].reshape(Ho * Wo, c1)
        sc = jnp.dot(xs.astype(jnp.bfloat16), ws_ref[...],
                     preferred_element_type=jnp.float32) + bs_ref[...]
        o_ref[0] = jnp.maximum(z + sc, 0.0)

    return kernel


def _block_s2_tail_call(t1s2d, xsub, w2, b2, w3, b3, ws, bs):
    n, Hh, Wh, c24 = t1s2d.shape
    _, Ho, Wo, c1 = xsub.shape
    c2 = w2.shape[-1]
    c3 = w3.shape[-1]
    P = Ho * Wo
    flops = 2 * n * P * (4 * c24 * c2 + c2 * c3 + c1 * c3)
    out = pl.pallas_call(
        _make_block_s2_tail_kernel(Ho, Wo),
        out_shape=jax.ShapeDtypeStruct((n, P, c3), jnp.float32),
        grid=(n,),
        in_specs=[pl.BlockSpec((1, Hh, Wh, c24), lambda i: (i, 0, 0, 0)),
                  pl.BlockSpec((1, Ho, Wo, c1), lambda i: (i, 0, 0, 0)),
                  pl.BlockSpec((4, c24, c2), lambda i: (0, 0, 0)),
                  pl.BlockSpec((1, c2), lambda i: (0, 0)),
                  pl.BlockSpec((c2, c3), lambda i: (0, 0)),
                  pl.BlockSpec((1, c3), lambda i: (0, 0)),
                  pl.BlockSpec((c1, c3), lambda i: (0, 0)),
                  pl.BlockSpec((1, c3), lambda i: (0, 0))],
        out_specs=pl.BlockSpec((1, P, c3), lambda i: (i, 0, 0)),
        compiler_params=pltpu.CompilerParams(
            dimension_semantics=("parallel",),
            vmem_limit_bytes=_VMEM_LIMIT),
        cost_estimate=pl.CostEstimate(
            flops=flops,
            transcendentals=n * P * c2,
            bytes_accessed=4 * (t1s2d.size + xsub.size + n * P * c3)
            + 2 * (4 * c24 * c2 + c2 * c3 + c1 * c3)),
    )(t1s2d, xsub, w2, b2, w3, b3, ws, bs)
    return out.reshape(n, Ho, Wo, c3)


# ---------------------------------------------------------------------------
# Kernel 5: MaxPool2d(3, stride=2, padding=1) over phase-split conv output
# ---------------------------------------------------------------------------
def _make_maxpool3s2_kernel(Hp, Wp):
    def kernel(x_ref, o_ref):
        x = x_ref[0]                                 # (4, Hh, Wh, c)
        res = None
        for kh in range(3):
            p, a = kh % 2, kh // 2
            for kw in range(3):
                q, b = kw % 2, kw // 2
                tap = x[2 * p + q, a:a + Hp, b:b + Wp, :]
                res = tap if res is None else jnp.maximum(res, tap)
        o_ref[0] = res

    return kernel


def _maxpool3s2_call(ph, Hp, Wp):
    n, _, Hh, Wh, c = ph.shape
    return pl.pallas_call(
        _make_maxpool3s2_kernel(Hp, Wp),
        out_shape=jax.ShapeDtypeStruct((n, Hp, Wp, c), jnp.float32),
        grid=(n,),
        in_specs=[pl.BlockSpec((1, 4, Hh, Wh, c), lambda i: (i, 0, 0, 0, 0))],
        out_specs=pl.BlockSpec((1, Hp, Wp, c), lambda i: (i, 0, 0, 0)),
        compiler_params=pltpu.CompilerParams(
            dimension_semantics=("parallel",),
            vmem_limit_bytes=_VMEM_LIMIT),
        cost_estimate=pl.CostEstimate(
            flops=9 * n * Hp * Wp * c,
            transcendentals=0,
            bytes_accessed=4 * (ph.size + n * Hp * Wp * c)),
    )(ph)


# ---------------------------------------------------------------------------
# Module-level forwards (NHWC activations inside, NCHW at the boundary)
# ---------------------------------------------------------------------------
def resnet_block_forward(x, bp, s):
    n, H, W, c1 = x.shape
    c2 = bp["cv1"][0].shape[0]
    c3 = bp["cv3"][0].shape[0]
    has_proj = (s != 1) or (c1 != c3)

    w1f, b1f = _fold_1x1(*bp["cv1"])
    w3f, b3f = _fold_1x1(*bp["cv3"])
    wsf = bsf = None
    if has_proj:
        wsf, bsf = _fold_1x1(*bp["shortcut"])

    if s == 1:
        w2f, b2f = _fold_3x3_s1(*bp["cv2"])
        return _block_s1_call(x, w1f, b1f, w2f, b2f, w3f, b3f, wsf, bsf)

    # s == 2: cv1 in its own kernel, then a fused (cv2 + cv3 + shortcut + relu)
    # tail whose stride-2 conv consumes a space-to-depth (1x-byte) input.
    assert s == 2 and H % 2 == 0 and W % 2 == 0, "stride-2 block needs even H, W"
    w2f, b2f = _fold_s2_conv(*bp["cv2"])
    t1 = _conv1x1_silu_call(x.reshape(n, H * W, c1), w1f, b1f).reshape(n, H, W, c2)
    t1p = jnp.pad(t1, ((0, 0), (1, 1), (1, 1), (0, 0)))
    t1s2d = _space_to_depth2(t1p)
    xsub = x[:, ::2, ::2, :]
    return _block_s2_tail_call(t1s2d, xsub, w2f, b2f, w3f, b3f, wsf, bsf)


def resnet_stem_forward(x, conv_p):
    """is_first path: Conv(7x7, s=2, p=3)+BN+SiLU -> MaxPool2d(3, s=2, p=1)."""
    n, H, W, c1 = x.shape
    assert H % 2 == 0 and W % 2 == 0, "stem needs even H, W"
    wf, bf = _fold_s2_conv(*conv_p)                  # (16, 4*c1, c2)
    xp = jnp.pad(x, ((0, 0), (3, 3), (3, 3), (0, 0)))
    xs2d = _space_to_depth2(xp)
    Ho = (H - 1) // 2 + 1
    Wo = (W - 1) // 2 + 1
    co = _s2d_conv_bn_silu_call(xs2d, wf, bf, kt=4, Ho=Ho, Wo=Wo)

    pb = 1 + (Ho % 2)                                # pad so padded dims are even
    pr = 1 + (Wo % 2)
    cop = jnp.pad(co, ((0, 0), (1, pb), (1, pr), (0, 0)),
                  constant_values=-jnp.inf)
    ph = _phase_split2(cop)
    Hp = (Ho - 1) // 2 + 1
    Wp = (Wo - 1) // 2 + 1
    return _maxpool3s2_call(ph, Hp, Wp)


def resnet_layer_forward(x_nchw, params):
    """ResNetLayer forward; NCHW in, NCHW out (matches the PyTorch module)."""
    x = jnp.transpose(x_nchw, (0, 2, 3, 1)).astype(jnp.float32)
    if params["is_first"]:
        y = resnet_stem_forward(x, params["conv"])
    else:
        y = x
        for i, bp in enumerate(params["blocks"]):
            y = resnet_block_forward(y, bp, params["s"] if i == 0 else 1)
    return jnp.transpose(y, (0, 3, 1, 2))


# ---------------------------------------------------------------------------
# Pure-JAX reference (independent ops) for correctness checking
# ---------------------------------------------------------------------------
def _conv_bn_ref(x, w, g, be, m, v, stride, pad, act):
    z = lax.conv_general_dilated(x, w, (stride, stride),
                                 ((pad, pad), (pad, pad)),
                                 dimension_numbers=("NCHW", "OIHW", "NCHW"))
    s = g / jnp.sqrt(v + BN_EPS)
    z = z * s[None, :, None, None] + (be - m * s)[None, :, None, None]
    return z * jax.nn.sigmoid(z) if act else z


def resnet_block_ref(x, bp, s):
    y = _conv_bn_ref(x, *bp["cv1"], 1, 0, True)
    y = _conv_bn_ref(y, *bp["cv2"], s, 1, True)
    y = _conv_bn_ref(y, *bp["cv3"], 1, 0, False)
    sc = (_conv_bn_ref(x, *bp["shortcut"], s, 0, False)
          if bp["shortcut"] is not None else x)
    return jnp.maximum(y + sc, 0.0)


def resnet_layer_ref(x, params):
    if params["is_first"]:
        y = _conv_bn_ref(x, *params["conv"], 2, 3, True)
        return lax.reduce_window(y, -jnp.inf, lax.max, (1, 1, 3, 3), (1, 1, 2, 2),
                                 ((0, 0), (0, 0), (1, 1), (1, 1)))
    y = x
    for i, bp in enumerate(params["blocks"]):
        y = resnet_block_ref(y, bp, params["s"] if i == 0 else 1)
    return y


# ---------------------------------------------------------------------------
# Parameter builders + self-test
# ---------------------------------------------------------------------------
def _make_conv_params(key, cout, cin, k):
    ks = jax.random.split(key, 5)
    w = jax.random.normal(ks[0], (cout, cin, k, k), jnp.float32)
    w = w / float((cin * k * k) ** 0.5)
    g = 1.0 + 0.1 * jax.random.normal(ks[1], (cout,), jnp.float32)
    be = 0.1 * jax.random.normal(ks[2], (cout,), jnp.float32)
    m = 0.1 * jax.random.normal(ks[3], (cout,), jnp.float32)
    v = 0.9 + 0.1 * jax.random.uniform(ks[4], (cout,), jnp.float32)
    return (w, g, be, m, v)


def _make_block_params(key, c1, c2, s, e=4):
    c3 = e * c2
    ks = jax.random.split(key, 4)
    bp = {"cv1": _make_conv_params(ks[0], c2, c1, 1),
          "cv2": _make_conv_params(ks[1], c2, c2, 3),
          "cv3": _make_conv_params(ks[2], c3, c2, 1),
          "shortcut": None}
    if s != 1 or c1 != c3:
        bp["shortcut"] = _make_conv_params(ks[3], c3, c1, 1)
    return bp


def _make_layer_params(key, c1, c2, s=1, is_first=False, n=1, e=4):
    if is_first:
        return {"is_first": True, "conv": _make_conv_params(key, c2, c1, 7)}
    ks = jax.random.split(key, n)
    blocks = [_make_block_params(ks[0], c1, c2, s, e)]
    for i in range(1, n):
        blocks.append(_make_block_params(ks[i], e * c2, c2, 1, e))
    return {"is_first": False, "s": s, "blocks": blocks}


if __name__ == "__main__":
    root = jax.random.PRNGKey(0)
    kx, ka, kb, kc = jax.random.split(root, 4)

    tests = [
        # ResNetLayer(is_first=True): Conv(7x7,s2,p3)+BN+SiLU -> MaxPool(3,s2,p1)
        ("is_first_stem",
         jax.random.normal(jax.random.fold_in(kx, 0), (2, 4, 16, 16), jnp.float32),
         _make_layer_params(ka, 4, 32, is_first=True)),
        # ResNetLayer(n=2, s=1): projection-shortcut block then identity block
        ("blocks_s1",
         jax.random.normal(jax.random.fold_in(kx, 1), (2, 32, 16, 16), jnp.float32),
         _make_layer_params(kb, 32, 32, s=1, n=2)),
        # ResNetLayer(n=1, s=2): down-sampling block (stride-2 cv2 + projection)
        ("block_s2",
         jax.random.normal(jax.random.fold_in(kx, 2), (2, 32, 16, 16), jnp.float32),
         _make_layer_params(kc, 32, 16, s=2, n=1)),
    ]

    for name, x, params in tests:
        out = jax.block_until_ready(resnet_layer_forward(x, params))
        ref = jax.block_until_ready(resnet_layer_ref(x, params))
        assert out.shape == ref.shape, (name, out.shape, ref.shape)
        err = float(jnp.max(jnp.abs(out - ref)))
        scale = float(jnp.max(jnp.abs(ref))) + 1e-6
        if not err <= 5e-2 * scale:
            raise AssertionError(
                f"{name}: Pallas vs reference mismatch: max abs err {err:.4e}, "
                f"ref max {scale:.4e}")
    print("KERNEL_OK")
</pallas_src>

<mosaic_0001>
module attributes {stable_mosaic.version = 11 : i64} {
  func.func @kernel(%arg0: i32, %arg1: memref<1x11x11x16xf32, #tpu.memory_space<vmem>>, %arg2: memref<16x16x32xbf16, #tpu.memory_space<vmem>>, %arg3: memref<1x32xf32, #tpu.memory_space<vmem>>, %arg4: memref<1x64x32xf32, #tpu.memory_space<vmem>>) attributes {dimension_semantics = [#tpu.dimension_semantics<parallel>], iteration_bounds = array<i64: 2>, scalar_prefetch = 0 : i64, scratch_operands = 0 : i64, tpu.core_type = #tpu.core_type<tc>, window_params = [{transform_indices = @transform_0, window_bounds = array<i64: 1, 11, 11, 16>}, {pipeline_mode = #tpu.pipeline_mode<synchronous>, transform_indices = @transform_1, window_bounds = array<i64: 16, 16, 32>}, {pipeline_mode = #tpu.pipeline_mode<synchronous>, transform_indices = @transform_2, window_bounds = array<i64: 1, 32>}, {transform_indices = @transform_3, window_bounds = array<i64: 1, 64, 32>}]} {
    %c0 = arith.constant 0 : index
    %c0_0 = arith.constant 0 : index
    %c0_1 = arith.constant 0 : index
    %c0_2 = arith.constant 0 : index
    %0 = vector.load %arg1[%c0, %c0_0, %c0_1, %c0_2] : memref<1x11x11x16xf32, #tpu.memory_space<vmem>>, vector<1x11x11x16xf32>
    %1 = vector.shape_cast %0 : vector<1x11x11x16xf32> to vector<11x11x16xf32>
    %2 = arith.truncf %1 : vector<11x11x16xf32> to vector<11x11x16xbf16>
    %cst = arith.constant 0.000000e+00 : f32
    %3 = vector.broadcast %cst : f32 to vector<64x32xf32>
    %4 = vector.extract_strided_slice %2 {offsets = [0, 0, 0], sizes = [8, 8, 16], strides = [1, 1, 1]} : vector<11x11x16xbf16> to vector<8x8x16xbf16>
    %5 = vector.shape_cast %4 : vector<8x8x16xbf16> to vector<64x16xbf16>
    %c0_3 = arith.constant 0 : index
    %c0_4 = arith.constant 0 : index
    %c0_5 = arith.constant 0 : index
    %6 = vector.load %arg2[%c0_3, %c0_4, %c0_5] : memref<16x16x32xbf16, #tpu.memory_space<vmem>>, vector<1x16x32xbf16>
    %7 = vector.shape_cast %6 : vector<1x16x32xbf16> to vector<16x32xbf16>
    %cst_6 = arith.constant dense<0.000000e+00> : vector<64x32xf32>
    %8 = tpu.matmul %5, %7, %cst_6 {dimension_numbers = #tpu.dot_dimension_numbers<[1], [0], [0], [1], [0, 0, 1, 1], [], []>} : vector<64x16xbf16>, vector<16x32xbf16>, vector<64x32xf32> -> vector<64x32xf32>
    %9 = arith.addf %3, %8 : vector<64x32xf32>
    %10 = vector.extract_strided_slice %2 {offsets = [0, 1, 0], sizes = [8, 8, 16], strides = [1, 1, 1]} : vector<11x11x16xbf16> to vector<8x8x16xbf16>
    %11 = vector.shape_cast %10 : vector<8x8x16xbf16> to vector<64x16xbf16>
    %c1 = arith.constant 1 : index
    %c0_7 = arith.constant 0 : index
    %c0_8 = arith.constant 0 : index
    %12 = vector.load %arg2[%c1, %c0_7, %c0_8] : memref<16x16x32xbf16, #tpu.memory_space<vmem>>, vector<1x16x32xbf16>
    %13 = vector.shape_cast %12 : vector<1x16x32xbf16> to vector<16x32xbf16>
    %cst_9 = arith.constant dense<0.000000e+00> : vector<64x32xf32>
    %14 = tpu.matmul %11, %13, %cst_9 {dimension_numbers = #tpu.dot_dimension_numbers<[1], [0], [0], [1], [0, 0, 1, 1], [], []>} : vector<64x16xbf16>, vector<16x32xbf16>, vector<64x32xf32> -> vector<64x32xf32>
    %15 = arith.addf %9, %14 : vector<64x32xf32>
    %16 = vector.extract_strided_slice %2 {offsets = [0, 2, 0], sizes = [8, 8, 16], strides = [1, 1, 1]} : vector<11x11x16xbf16> to vector<8x8x16xbf16>
    %17 = vector.shape_cast %16 : vector<8x8x16xbf16> to vector<64x16xbf16>
    %c2 = arith.constant 2 : index
    %c0_10 = arith.constant 0 : index
    %c0_11 = arith.constant 0 : index
    %18 = vector.load %arg2[%c2, %c0_10, %c0_11] : memref<16x16x32xbf16, #tpu.memory_space<vmem>>, vector<1x16x32xbf16>
    %19 = vector.shape_cast %18 : vector<1x16x32xbf16> to vector<16x32xbf16>
    %cst_12 = arith.constant dense<0.000000e+00> : vector<64x32xf32>
    %20 = tpu.matmul %17, %19, %cst_12 {dimension_numbers = #tpu.dot_dimension_numbers<[1], [0], [0], [1], [0, 0, 1, 1], [], []>} : vector<64x16xbf16>, vector<16x32xbf16>, vector<64x32xf32> -> vector<64x32xf32>
    %21 = arith.addf %15, %20 : vector<64x32xf32>
    %22 = vector.extract_strided_slice %2 {offsets = [0, 3, 0], sizes = [8, 8, 16], strides = [1, 1, 1]} : vector<11x11x16xbf16> to vector<8x8x16xbf16>
    %23 = vector.shape_cast %22 : vector<8x8x16xbf16> to vector<64x16xbf16>
    %c3 = arith.constant 3 : index
    %c0_13 = arith.constant 0 : index
    %c0_14 = arith.constant 0 : index
    %24 = vector.load %arg2[%c3, %c0_13, %c0_14] : memref<16x16x32xbf16, #tpu.memory_space<vmem>>, vector<1x16x32xbf16>
    %25 = vector.shape_cast %24 : vector<1x16x32xbf16> to vector<16x32xbf16>
    %cst_15 = arith.constant dense<0.000000e+00> : vector<64x32xf32>
    %26 = tpu.matmul %23, %25, %cst_15 {dimension_numbers = #tpu.dot_dimension_numbers<[1], [0], [0], [1], [0, 0, 1, 1], [], []>} : vector<64x16xbf16>, vector<16x32xbf16>, vector<64x32xf32> -> vector<64x32xf32>
    %27 = arith.addf %21, %26 : vector<64x32xf32>
    %28 = vector.extract_strided_slice %2 {offsets = [1, 0, 0], sizes = [8, 8, 16], strides = [1, 1, 1]} : vector<11x11x16xbf16> to vector<8x8x16xbf16>
    %29 = vector.shape_cast %28 : vector<8x8x16xbf16> to vector<64x16xbf16>
    %c4 = arith.constant 4 : index
    %c0_16 = arith.constant 0 : index
    %c0_17 = arith.constant 0 : index
    %30 = vector.load %arg2[%c4, %c0_16, %c0_17] : memref<16x16x32xbf16, #tpu.memory_space<vmem>>, vector<1x16x32xbf16>
    %31 = vector.shape_cast %30 : vector<1x16x32xbf16> to vector<16x32xbf16>
    %cst_18 = arith.constant dense<0.000000e+00> : vector<64x32xf32>
    %32 = tpu.matmul %29, %31, %cst_18 {dimension_numbers = #tpu.dot_dimension_numbers<[1], [0], [0], [1], [0, 0, 1, 1], [], []>} : vector<64x16xbf16>, vector<16x32xbf16>, vector<64x32xf32> -> vector<64x32xf32>
    %33 = arith.addf %27, %32 : vector<64x32xf32>
    %34 = vector.extract_strided_slice %2 {offsets = [1, 1, 0], sizes = [8, 8, 16], strides = [1, 1, 1]} : vector<11x11x16xbf16> to vector<8x8x16xbf16>
    %35 = vector.shape_cast %34 : vector<8x8x16xbf16> to vector<64x16xbf16>
    %c5 = arith.constant 5 : index
    %c0_19 = arith.constant 0 : index
    %c0_20 = arith.constant 0 : index
    %36 = vector.load %arg2[%c5, %c0_19, %c0_20] : memref<16x16x32xbf16, #tpu.memory_space<vmem>>, vector<1x16x32xbf16>
    %37 = vector.shape_cast %36 : vector<1x16x32xbf16> to vector<16x32xbf16>
    %cst_21 = arith.constant dense<0.000000e+00> : vector<64x32xf32>
    %38 = tpu.matmul %35, %37, %cst_21 {dimension_numbers = #tpu.dot_dimension_numbers<[1], [0], [0], [1], [0, 0, 1, 1], [], []>} : vector<64x16xbf16>, vector<16x32xbf16>, vector<64x32xf32> -> vector<64x32xf32>
    %39 = arith.addf %33, %38 : vector<64x32xf32>
    %40 = vector.extract_strided_slice %2 {offsets = [1, 2, 0], sizes = [8, 8, 16], strides = [1, 1, 1]} : vector<11x11x16xbf16> to vector<8x8x16xbf16>
    %41 = vector.shape_cast %40 : vector<8x8x16xbf16> to vector<64x16xbf16>
    %c6 = arith.constant 6 : index
    %c0_22 = arith.constant 0 : index
    %c0_23 = arith.constant 0 : index
    %42 = vector.load %arg2[%c6, %c0_22, %c0_23] : memref<16x16x32xbf16, #tpu.memory_space<vmem>>, vector<1x16x32xbf16>
    %43 = vector.shape_cast %42 : vector<1x16x32xbf16> to vector<16x32xbf16>
    %cst_24 = arith.constant dense<0.000000e+00> : vector<64x32xf32>
    %44 = tpu.matmul %41, %43, %cst_24 {dimension_numbers = #tpu.dot_dimension_numbers<[1], [0], [0], [1], [0, 0, 1, 1], [], []>} : vector<64x16xbf16>, vector<16x32xbf16>, vector<64x32xf32> -> vector<64x32xf32>
    %45 = arith.addf %39, %44 : vector<64x32xf32>
    %46 = vector.extract_strided_slice %2 {offsets = [1, 3, 0], sizes = [8, 8, 16], strides = [1, 1, 1]} : vector<11x11x16xbf16> to vector<8x8x16xbf16>
    %47 = vector.shape_cast %46 : vector<8x8x16xbf16> to vector<64x16xbf16>
    %c7 = arith.constant 7 : index
    %c0_25 = arith.constant 0 : index
    %c0_26 = arith.constant 0 : index
    %48 = vector.load %arg2[%c7, %c0_25, %c0_26] : memref<16x16x32xbf16, #tpu.memory_space<vmem>>, vector<1x16x32xbf16>
    %49 = vector.shape_cast %48 : vector<1x16x32xbf16> to vector<16x32xbf16>
    %cst_27 = arith.constant dense<0.000000e+00> : vector<64x32xf32>
    %50 = tpu.matmul %47, %49, %cst_27 {dimension_numbers = #tpu.dot_dimension_numbers<[1], [0], [0], [1], [0, 0, 1, 1], [], []>} : vector<64x16xbf16>, vector<16x32xbf16>, vector<64x32xf32> -> vector<64x32xf32>
    %51 = arith.addf %45, %50 : vector<64x32xf32>
    %52 = vector.extract_strided_slice %2 {offsets = [2, 0, 0], sizes = [8, 8, 16], strides = [1, 1, 1]} : vector<11x11x16xbf16> to vector<8x8x16xbf16>
    %53 = vector.shape_cast %52 : vector<8x8x16xbf16> to vector<64x16xbf16>
    %c8 = arith.constant 8 : index
    %c0_28 = arith.constant 0 : index
    %c0_29 = arith.constant 0 : index
    %54 = vector.load %arg2[%c8, %c0_28, %c0_29] : memref<16x16x32xbf16, #tpu.memory_space<vmem>>, vector<1x16x32xbf16>
    %55 = vector.shape_cast %54 : vector<1x16x32xbf16> to vector<16x32xbf16>
    %cst_30 = arith.constant dense<0.000000e+00> : vector<64x32xf32>
    %56 = tpu.matmul %53, %55, %cst_30 {dimension_numbers = #tpu.dot_dimension_numbers<[1], [0], [0], [1], [0, 0, 1, 1], [], []>} : vector<64x16xbf16>, vector<16x32xbf16>, vector<64x32xf32> -> vector<64x32xf32>
    %57 = arith.addf %51, %56 : vector<64x32xf32>
    %58 = vector.extract_strided_slice %2 {offsets = [2, 1, 0], sizes = [8, 8, 16], strides = [1, 1, 1]} : vector<11x11x16xbf16> to vector<8x8x16xbf16>
    %59 = vector.shape_cast %58 : vector<8x8x16xbf16> to vector<64x16xbf16>
    %c9 = arith.constant 9 : index
    %c0_31 = arith.constant 0 : index
    %c0_32 = arith.constant 0 : index
    %60 = vector.load %arg2[%c9, %c0_31, %c0_32] : memref<16x16x32xbf16, #tpu.memory_space<vmem>>, vector<1x16x32xbf16>
    %61 = vector.shape_cast %60 : vector<1x16x32xbf16> to vector<16x32xbf16>
    %cst_33 = arith.constant dense<0.000000e+00> : vector<64x32xf32>
    %62 = tpu.matmul %59, %61, %cst_33 {dimension_numbers = #tpu.dot_dimension_numbers<[1], [0], [0], [1], [0, 0, 1, 1], [], []>} : vector<64x16xbf16>, vector<16x32xbf16>, vector<64x32xf32> -> vector<64x32xf32>
    %63 = arith.addf %57, %62 : vector<64x32xf32>
    %64 = vector.extract_strided_slice %2 {offsets = [2, 2, 0], sizes = [8, 8, 16], strides = [1, 1, 1]} : vector<11x11x16xbf16> to vector<8x8x16xbf16>
    %65 = vector.shape_cast %64 : vector<8x8x16xbf16> to vector<64x16xbf16>
    %c10 = arith.constant 10 : index
    %c0_34 = arith.constant 0 : index
    %c0_35 = arith.constant 0 : index
    %66 = vector.load %arg2[%c10, %c0_34, %c0_35] : memref<16x16x32xbf16, #tpu.memory_space<vmem>>, vector<1x16x32xbf16>
    %67 = vector.shape_cast %66 : vector<1x16x32xbf16> to vector<16x32xbf16>
    %cst_36 = arith.constant dense<0.000000e+00> : vector<64x32xf32>
    %68 = tpu.matmul %65, %67, %cst_36 {dimension_numbers = #tpu.dot_dimension_numbers<[1], [0], [0], [1], [0, 0, 1, 1], [], []>} : vector<64x16xbf16>, vector<16x32xbf16>, vector<64x32xf32> -> vector<64x32xf32>
    %69 = arith.addf %63, %68 : vector<64x32xf32>
    %70 = vector.extract_strided_slice %2 {offsets = [2, 3, 0], sizes = [8, 8, 16], strides = [1, 1, 1]} : vector<11x11x16xbf16> to vector<8x8x16xbf16>
    %71 = vector.shape_cast %70 : vector<8x8x16xbf16> to vector<64x16xbf16>
    %c11 = arith.constant 11 : index
    %c0_37 = arith.constant 0 : index
    %c0_38 = arith.constant 0 : index
    %72 = vector.load %arg2[%c11, %c0_37, %c0_38] : memref<16x16x32xbf16, #tpu.memory_space<vmem>>, vector<1x16x32xbf16>
    %73 = vector.shape_cast %72 : vector<1x16x32xbf16> to vector<16x32xbf16>
    %cst_39 = arith.constant dense<0.000000e+00> : vector<64x32xf32>
    %74 = tpu.matmul %71, %73, %cst_39 {dimension_numbers = #tpu.dot_dimension_numbers<[1], [0], [0], [1], [0, 0, 1, 1], [], []>} : vector<64x16xbf16>, vector<16x32xbf16>, vector<64x32xf32> -> vector<64x32xf32>
    %75 = arith.addf %69, %74 : vector<64x32xf32>
    %76 = vector.extract_strided_slice %2 {offsets = [3, 0, 0], sizes = [8, 8, 16], strides = [1, 1, 1]} : vector<11x11x16xbf16> to vector<8x8x16xbf16>
    %77 = vector.shape_cast %76 : vector<8x8x16xbf16> to vector<64x16xbf16>
    %c12 = arith.constant 12 : index
    %c0_40 = arith.constant 0 : index
    %c0_41 = arith.constant 0 : index
    %78 = vector.load %arg2[%c12, %c0_40, %c0_41] : memref<16x16x32xbf16, #tpu.memory_space<vmem>>, vector<1x16x32xbf16>
    %79 = vector.shape_cast %78 : vector<1x16x32xbf16> to vector<16x32xbf16>
    %cst_42 = arith.constant dense<0.000000e+00> : vector<64x32xf32>
    %80 = tpu.matmul %77, %79, %cst_42 {dimension_numbers = #tpu.dot_dimension_numbers<[1], [0], [0], [1], [0, 0, 1, 1], [], []>} : vector<64x16xbf16>, vector<16x32xbf16>, vector<64x32xf32> -> vector<64x32xf32>
    %81 = arith.addf %75, %80 : vector<64x32xf32>
    %82 = vector.extract_strided_slice %2 {offsets = [3, 1, 0], sizes = [8, 8, 16], strides = [1, 1, 1]} : vector<11x11x16xbf16> to vector<8x8x16xbf16>
    %83 = vector.shape_cast %82 : vector<8x8x16xbf16> to vector<64x16xbf16>
    %c13 = arith.constant 13 : index
    %c0_43 = arith.constant 0 : index
    %c0_44 = arith.constant 0 : index
    %84 = vector.load %arg2[%c13, %c0_43, %c0_44] : memref<16x16x32xbf16, #tpu.memory_space<vmem>>, vector<1x16x32xbf16>
    %85 = vector.shape_cast %84 : vector<1x16x32xbf16> to vector<16x32xbf16>
    %cst_45 = arith.constant dense<0.000000e+00> : vector<64x32xf32>
    %86 = tpu.matmul %83, %85, %cst_45 {dimension_numbers = #tpu.dot_dimension_numbers<[1], [0], [0], [1], [0, 0, 1, 1], [], []>} : vector<64x16xbf16>, vector<16x32xbf16>, vector<64x32xf32> -> vector<64x32xf32>
    %87 = arith.addf %81, %86 : vector<64x32xf32>
    %88 = vector.extract_strided_slice %2 {offsets = [3, 2, 0], sizes = [8, 8, 16], strides = [1, 1, 1]} : vector<11x11x16xbf16> to vector<8x8x16xbf16>
    %89 = vector.shape_cast %88 : vector<8x8x16xbf16> to vector<64x16xbf16>
    %c14 = arith.constant 14 : index
    %c0_46 = arith.constant 0 : index
    %c0_47 = arith.constant 0 : index
    %90 = vector.load %arg2[%c14, %c0_46, %c0_47] : memref<16x16x32xbf16, #tpu.memory_space<vmem>>, vector<1x16x32xbf16>
    %91 = vector.shape_cast %90 : vector<1x16x32xbf16> to vector<16x32xbf16>
    %cst_48 = arith.constant dense<0.000000e+00> : vector<64x32xf32>
    %92 = tpu.matmul %89, %91, %cst_48 {dimension_numbers = #tpu.dot_dimension_numbers<[1], [0], [0], [1], [0, 0, 1, 1], [], []>} : vector<64x16xbf16>, vector<16x32xbf16>, vector<64x32xf32> -> vector<64x32xf32>
    %93 = arith.addf %87, %92 : vector<64x32xf32>
    %94 = vector.extract_strided_slice %2 {offsets = [3, 3, 0], sizes = [8, 8, 16], strides = [1, 1, 1]} : vector<11x11x16xbf16> to vector<8x8x16xbf16>
    %95 = vector.shape_cast %94 : vector<8x8x16xbf16> to vector<64x16xbf16>
    %c15 = arith.constant 15 : index
    %c0_49 = arith.constant 0 : index
    %c0_50 = arith.constant 0 : index
    %96 = vector.load %arg2[%c15, %c0_49, %c0_50] : memref<16x16x32xbf16, #tpu.memory_space<vmem>>, vector<1x16x32xbf16>
    %97 = vector.shape_cast %96 : vector<1x16x32xbf16> to vector<16x32xbf16>
    %cst_51 = arith.constant dense<0.000000e+00> : vector<64x32xf32>
    %98 = tpu.matmul %95, %97, %cst_51 {dimension_numbers = #tpu.dot_dimension_numbers<[1], [0], [0], [1], [0, 0, 1, 1], [], []>} : vector<64x16xbf16>, vector<16x32xbf16>, vector<64x32xf32> -> vector<64x32xf32>
    %99 = arith.addf %93, %98 : vector<64x32xf32>
    %c0_52 = arith.constant 0 : index
    %c0_53 = arith.constant 0 : index
    %100 = vector.load %arg3[%c0_52, %c0_53] : memref<1x32xf32, #tpu.memory_space<vmem>>, vector<1x32xf32>
    %101 = vector.broadcast %100 : vector<1x32xf32> to vector<64x32xf32>
    %102 = arith.addf %99, %101 : vector<64x32xf32>
    %103 = arith.negf %102 : vector<64x32xf32>
    %104 = math.exp %103 : vector<64x32xf32>
    %cst_54 = arith.constant 1.000000e+00 : f32
    %105 = vector.broadcast %cst_54 : f32 to vector<64x32xf32>
    %106 = arith.addf %105, %104 : vector<64x32xf32>
    %107 = arith.divf %105, %106 : vector<64x32xf32>
    %108 = arith.mulf %102, %107 : vector<64x32xf32>
    %c0_55 = arith.constant 0 : index
    %c0_56 = arith.constant 0 : index
    %c0_57 = arith.constant 0 : index
    %109 = vector.load %arg4[%c0_55, %c0_56, %c0_57] : memref<1x64x32xf32, #tpu.memory_space<vmem>>, vector<1x64x32xf32>
    %110 = vector.shape_cast %109 : vector<1x64x32xf32> to vector<64x32xf32>
    %111 = vector.shape_cast %108 : vector<64x32xf32> to vector<1x64x32xf32>
    tpu.vector_store %arg4[%c0_55, %c0_56, %c0_57], %111 {strides = array<i32>} : memref<1x64x32xf32, #tpu.memory_space<vmem>>, vector<1x64x32xf32>,
    return
  }
  func.func @transform_0(%arg0: i32) -> (i32, i32, i32, i32) {
    %c0_i32 = arith.constant 0 : i32
    %c0_i32_0 = arith.constant 0 : i32
    %c0_i32_1 = arith.constant 0 : i32
    %c0_i32_2 = arith.constant 0 : i32
    return %arg0, %c0_i32, %c0_i32_0, %c0_i32_1 : i32, i32, i32, i32
  }
  func.func @transform_1(%arg0: i32) -> (i32, i32, i32) {
    %c0_i32 = arith.constant 0 : i32
    %c0_i32_0 = arith.constant 0 : i32
    %c0_i32_1 = arith.constant 0 : i32
    %c0_i32_2 = arith.constant 0 : i32
    return %c0_i32, %c0_i32_0, %c0_i32_1 : i32, i32, i32
  }
  func.func @transform_2(%arg0: i32) -> (i32, i32) {
    %c0_i32 = arith.constant 0 : i32
    %c0_i32_0 = arith.constant 0 : i32
    %c0_i32_1 = arith.constant 0 : i32
    return %c0_i32, %c0_i32_0 : i32, i32
  }
  func.func @transform_3(%arg0: i32) -> (i32, i32, i32) {
    %c0_i32 = arith.constant 0 : i32
    %c0_i32_0 = arith.constant 0 : i32
    %c0_i32_1 = arith.constant 0 : i32
    return %arg0, %c0_i32, %c0_i32_0 : i32, i32, i32
  }
}

</mosaic_0001>

<llo_original>
// kernel: tpu_custom_call.1
$region0: #{tpu_custom_call.1}
  #allocation0 [shape = 'u32[]', space=smem, size = 0x4, offset = 0x4, fixed_abs, tag = 'smem constant byte address 0x4 - core index']
  #allocation1 [shape = 'u32[144,128]{1,0:T(1,128)}', space=vmem, size = 0x12000, scoped, tag = 'internal scratch']
  %s0 = inlined_call_operand.vmem [shape: f32[2,11,11,16], index: 0, kind: input, shape index: {}]
  %s1 = inlined_call_operand.vmem [shape: bf16[16,16,32], index: 1, kind: input, shape index: {}]
  %s2 = inlined_call_operand.vmem [shape: f32[1,32], index: 2, kind: input, shape index: {}]
  %s3 = inlined_call_operand.vmem [shape: f32[2,64,32], index: 3, kind: output, shape index: {}]
  %s4 = sld [smem:[#allocation0]]
  $region45: #{tpu_custom_call.1} parent=0
    _
  %s6 = ssub.s32 1, %s4
  %s7 = scalar_select 0, %s6, %s4
  loop: start=0, step=1, limit=4
  $region2: #{tpu_custom_call.1} parent=0 // loop_pre_header
    _
  $region3: #{tpu_custom_call.1} parent=0 // loop_header
    %s9 = sphi 0, %s13
    %p10 = scmp.ge.s32.totalorder %s9, 4
    %s19 = sphi 0, %s21
    %s22 = sphi 0, %s19
    %s23 = sphi 0, %s22
    %s39 = sphi 0, %s23
    %s43 = sphi 0, %s43
    %s45 = sphi 0, %s43
    %s46 = sphi 0, %s45
    %s60 = sphi 0, %s46
    %s64 = sphi 0, %s64
    %s66 = sphi 0, %s64
    %s67 = sphi 0, %s66
    %s81 = sphi 0, %s67
    %s87 = sphi 0, %s89
    %s90 = sphi 0, %s87
    %s91 = sphi 0, %s90
    %s107 = sphi 0, %s91
  $region4: #{tpu_custom_call.1} parent=0 // loop_header_branch
    %12 = sbr.rel (%p10) target = $region8
  $region5: #{tpu_custom_call.1} parent=0 // loop_body
    %s14 = ssub.s32 %s9, 1
    %s15 = ssub.s32 %s9, 2
    %s16 = sadd.s32 %s9, 1
    %s17 = ssub.s32 %s9, %s16
    %p18 = scmp.eq.s32.totalorder %s17, 0
    %s20 = sadd.s32 %s19, 1
    %s21 = scalar_select %p18, %s19, %s20
    %p24 = pneg %p18
    %p25 = scmp.eq.s32.totalorder %s9, 1
    %p26 = por %p24, %p25
    %p27 = scmp.ne.s32.totalorder %s19, %s22
    %p28 = scmp.eq.s32.totalorder %s9, 0
    %p29 = por %p27, %p28
    %p30 = scmp.ne.s32.totalorder %s19, %s22
    %p31 = scmp.eq.s32.totalorder %s14, 1
    %p32 = por %p30, %p31
    %p33 = scmp.ne.s32.totalorder %s22, %s23
    %p34 = scmp.eq.s32.totalorder %s14, 0
    %p35 = por %p33, %p34
    %p36 = scmp.ne.s32.totalorder %s22, %s23
    %p37 = scmp.eq.s32.totalorder %s15, 1
    %p38 = por %p36, %p37
    %p40 = scmp.ne.s32.totalorder %s23, %s39
    %p41 = scmp.eq.s32.totalorder %s15, 0
    %p42 = por %p40, %p41
    %s44 = sadd.s32 %s43, 1
    %p47 = scmp.eq.s32.totalorder %s9, 1
    %p48 = scmp.ne.s32.totalorder %s43, %s45
    %p49 = scmp.eq.s32.totalorder %s9, 0
    %p50 = por %p48, %p49
    %p51 = scmp.ne.s32.totalorder %s43, %s45
    %p52 = scmp.eq.s32.totalorder %s14, 1
    %p53 = por %p51, %p52
    %p54 = scmp.ne.s32.totalorder %s45, %s46
    %p55 = scmp.eq.s32.totalorder %s14, 0
    %p56 = por %p54, %p55
    %p57 = scmp.ne.s32.totalorder %s45, %s46
    %p58 = scmp.eq.s32.totalorder %s15, 1
    %p59 = por %p57, %p58
    %p61 = scmp.ne.s32.totalorder %s46, %s60
    %p62 = scmp.eq.s32.totalorder %s15, 0
    %p63 = por %p61, %p62
    %s65 = sadd.s32 %s64, 1
    %p68 = scmp.eq.s32.totalorder %s9, 1
    %p69 = scmp.ne.s32.totalorder %s64, %s66
    %p70 = scmp.eq.s32.totalorder %s9, 0
    %p71 = por %p69, %p70
    %p72 = scmp.ne.s32.totalorder %s64, %s66
    %p73 = scmp.eq.s32.totalorder %s14, 1
    %p74 = por %p72, %p73
    %p75 = scmp.ne.s32.totalorder %s66, %s67
    %p76 = scmp.eq.s32.totalorder %s14, 0
    %p77 = por %p75, %p76
    %p78 = scmp.ne.s32.totalorder %s66, %s67
    %p79 = scmp.eq.s32.totalorder %s15, 1
    %p80 = por %p78, %p79
    %p82 = scmp.ne.s32.totalorder %s67, %s81
    %p83 = scmp.eq.s32.totalorder %s15, 0
    %p84 = por %p82, %p83
    %s85 = ssub.s32 %s9, %s16
    %p86 = scmp.eq.s32.totalorder %s85, 0
    %s88 = sadd.s32 %s87, 1
    %s89 = scalar_select %p86, %s87, %s88
    %p92 = pneg %p86
    %p93 = scmp.eq.s32.totalorder %s9, 1
    %p94 = por %p92, %p93
    %p95 = scmp.ne.s32.totalorder %s87, %s90
    %p96 = scmp.eq.s32.totalorder %s9, 0
    %p97 = por %p95, %p96
    %p98 = scmp.ne.s32.totalorder %s87, %s90
    %p99 = scmp.eq.s32.totalorder %s14, 1
    %p100 = por %p98, %p99
    %p101 = scmp.ne.s32.totalorder %s90, %s91
    %p102 = scmp.eq.s32.totalorder %s14, 0
    %p103 = por %p101, %p102
    %p104 = scmp.ne.s32.totalorder %s90, %s91
    %p105 = scmp.eq.s32.totalorder %s15, 1
    %p106 = por %p104, %p105
    %p108 = scmp.ne.s32.totalorder %s91, %s107
    %p109 = scmp.eq.s32.totalorder %s15, 0
    %p110 = por %p108, %p109
    %p111 = scmp.le.s32.totalorder 1, %s9
    %p112 = scmp.lt.s32.totalorder %s9, 3
    %p113 = pnand %p111, %p112
    %p114 = pneg %p113
    // Predicated region
    $region9: #{tpu_custom_call.1} parent=5 // pred_check
      _
    $region10: #{tpu_custom_call.1} parent=5 // pred_check_branch
      %116 = sbr.rel (%p113) target = $region12
    $region11: #{tpu_custom_call.1} parent=5 // pred_region
      %s117 = ssub.s32 %s9, 1
      // Predicated region
      $region13: #{tpu_custom_call.1} parent=11 // pred_check
        %p118 = pneg %p56
      $region14: #{tpu_custom_call.1} parent=11 // pred_check_branch
        %120 = sbr.rel (%p118) target = $region16
      $region15: #{tpu_custom_call.1} parent=11 // pred_region
        _
      $region16: #{tpu_custom_call.1} parent=11 // pred_fallthru
        _
      // Predicated region
      $region17: #{tpu_custom_call.1} parent=11 // pred_check
        %p121 = pneg %p77
      $region18: #{tpu_custom_call.1} parent=11 // pred_check_branch
        %123 = sbr.rel (%p121) target = $region20
      $region19: #{tpu_custom_call.1} parent=11 // pred_region
        _
      $region20: #{tpu_custom_call.1} parent=11 // pred_fallthru
        _
    $region12: #{tpu_custom_call.1} parent=5 // pred_fallthru
      _
    %p124 = scmp.lt.s32.totalorder %s9, 2
    // Predicated region
    $region21: #{tpu_custom_call.1} parent=5 // pred_check
      %p125 = pneg %p124
    $region22: #{tpu_custom_call.1} parent=5 // pred_check_branch
      %127 = sbr.rel (%p125) target = $region24
    $region23: #{tpu_custom_call.1} parent=5 // pred_region
      // Predicated region
      $region25: #{tpu_custom_call.1} parent=23 // pred_check
        %p128 = pneg %p29
      $region26: #{tpu_custom_call.1} parent=23 // pred_check_branch
        %130 = sbr.rel (%p128) target = $region28
      $region27: #{tpu_custom_call.1} parent=23 // pred_region
        %p131 = scmp.lt.s32.totalorder %s9, 1
        %s132 = scalar_select %p131, %s9, 1
        %s133 = smul.addr %s132, 22
        %s134 = smul.addr %s133, 8
        %s135 = scalar_lea.vmem %s0, %s134
      $region28: #{tpu_custom_call.1} parent=23 // pred_fallthru
        _
    $region24: #{tpu_custom_call.1} parent=5 // pred_fallthru
      _
    %p136 = scmp.le.s32.totalorder 1, %s9
    %p137 = scmp.lt.s32.totalorder %s9, 3
    %p138 = pnand %p136, %p137
    %p139 = pneg %p138
    // Predicated region
    $region29: #{tpu_custom_call.1} parent=5 // pred_check
      _
    $region30: #{tpu_custom_call.1} parent=5 // pred_check_branch
      %141 = sbr.rel (%p138) target = $region32
    $region31: #{tpu_custom_call.1} parent=5 // pred_region
      %s142 = ssub.s32 %s9, 1
      %p143 = scmp.lt.s32.totalorder %s14, 1
      %s144 = scalar_select %p143, %s14, 1
      %s145 = smul.addr %s144, 22
      %s146 = smul.addr %s145, 8
      %s147 = scalar_lea.vmem %s0, %s146
      %p148 = pneg %p35
      %p149 = pneg %p32
      %p150 = pneg %p56
      %p151 = pneg %p53
      %p152 = pneg %p77
      %p153 = pneg %p74
      %p154 = pneg %p103
      %p155 = pneg %p100
      %p156 = scmp.lt.s32.totalorder %s14, 1
      %s157 = scalar_select %p156, %s14, 1
      %s158 = smul.addr %s157, 8
      %s159 = smul.addr %s158, 8
      %s160 = scalar_lea.vmem %s3, %s159
      %p161 = scmp.lt.s32.totalorder %s14, 1
      %s162 = scalar_select %p161, %s14, 1
      %s163 = smul.addr %s162, 22
      %s164 = smul.addr %s163, 8
      %s165 = scalar_lea.vmem %s0, %s164
      %p166 = scmp.lt.s32.totalorder %s14, 1
      %s167 = scalar_select %p166, %s14, 1
      %s168 = smul.addr %s167, 8
      %s169 = smul.addr %s168, 8
      %s170 = scalar_lea.vmem %s3, %s169
      %v172 = vld [vmem:[%s165] sm:$0xff]
      %v173 = vld [vmem:[%s165 + $0x8] sm:$0x7]
      %v174 = vld [vmem:[%s165 + $0x10] sm:$0xff]
      %v175 = vld [vmem:[%s165 + $0x18] sm:$0x7]
      %v176 = vld [vmem:[%s165 + $0x20] sm:$0xff]
      %v177 = vld [vmem:[%s165 + $0x28] sm:$0x7]
      %v178 = vld [vmem:[%s165 + $0x30] sm:$0xff]
      %v179 = vld [vmem:[%s165 + $0x38] sm:$0x7]
      %v180 = vld [vmem:[%s165 + $0x40] sm:$0xff]
      %v181 = vld [vmem:[%s165 + $0x48] sm:$0x7]
      %v182 = vld [vmem:[%s165 + $0x50] sm:$0xff]
      %v183 = vld [vmem:[%s165 + $0x58] sm:$0x7]
      %v184 = vld [vmem:[%s165 + $0x60] sm:$0xff]
      %v185 = vld [vmem:[%s165 + $0x68] sm:$0x7]
      %v186 = vld [vmem:[%s165 + $0x70] sm:$0xff]
      %v187 = vld [vmem:[%s165 + $0x78] sm:$0x7]
      %v188 = vld [vmem:[%s165 + $0x80] sm:$0xff]
      %v189 = vld [vmem:[%s165 + $0x88] sm:$0x7]
      %v190 = vld [vmem:[%s165 + $0x90] sm:$0xff]
      %v191 = vld [vmem:[%s165 + $0x98] sm:$0x7]
      %v192 = vld [vmem:[%s165 + $0xa0] sm:$0xff]
      %v193 = vld [vmem:[%s165 + $0xa8] sm:$0x7]
      %v194 = vpack.c.bf16 %v173, %v172
      %v195 = vpack.c.bf16 %v175, %v174
      %v196 = vpack.c.bf16 %v177, %v176
      %v197 = vpack.c.bf16 %v179, %v178
      %v198 = vpack.c.bf16 %v181, %v180
      %v199 = vpack.c.bf16 %v183, %v182
      %v200 = vpack.c.bf16 %v185, %v184
      %v201 = vpack.c.bf16 %v187, %v186
      %v202 = vpack.c.bf16 %v189, %v188
      %v203 = vpack.c.bf16 %v191, %v190
      %v204 = vpack.c.bf16 %v193, %v192
      %v205 = vld [vmem:[%s1] sm:$0xf]
      %v206 = vld [vmem:[%s1 + $0x4] sm:$0xf]
      %v215 = vunpack.c.l.b16 %v194
      %v216 = vunpack.c.h.b16 %v194
      %v217 = vunpack.c.l.b16 %v195
      %v218 = vunpack.c.h.b16 %v195
      %v219 = vunpack.c.l.b16 %v196
      %v220 = vunpack.c.h.b16 %v196
      %v221 = vunpack.c.l.b16 %v197
      %v222 = vunpack.c.h.b16 %v197
      %v223 = vunpack.c.l.b16 %v198
      %v224 = vunpack.c.h.b16 %v198
      %v225 = vunpack.c.l.b16 %v199
      %v226 = vunpack.c.h.b16 %v199
      %v227 = vunpack.c.l.b16 %v200
      %v228 = vunpack.c.h.b16 %v200
      %v229 = vunpack.c.l.b16 %v201
      %v230 = vunpack.c.h.b16 %v201
      %v231 = vpack.c.b16 %v215, %v215
      %v232 = vpack.c.b16 %v216, %v216
      %v233 = vpack.c.b16 %v217, %v217
      %v234 = vpack.c.b16 %v218, %v218
      %v235 = vpack.c.b16 %v219, %v219
      %v236 = vpack.c.b16 %v220, %v220
      %v237 = vpack.c.b16 %v221, %v221
      %v238 = vpack.c.b16 %v222, %v222
      %v239 = vpack.c.b16 %v223, %v223
      %v240 = vpack.c.b16 %v224, %v224
      %v241 = vpack.c.b16 %v225, %v225
      %v242 = vpack.c.b16 %v226, %v226
      %v243 = vpack.c.b16 %v227, %v227
      %v244 = vpack.c.b16 %v228, %v228
      %v245 = vpack.c.b16 %v229, %v229
      %v246 = vpack.c.b16 %v230, %v230
      %vm247 = vsmask.f32 3328
      %vm248 = vsmask.f32 7440
      %vm249 = vmor %vm247, %vm248
      %v251 = vshrl.u32 %v231, 16
      %v253 = vrot.slane %v251, 4
      %v254 = vshll.u32 %v231, 16
      %v256 = vrot.slane %v254, 5
      %v257 = vor.u32 %v253, %v256
      %v258 = vrot.slane %v257, 4
      %v260 = vshll.u32 %v232, 16
      %v262 = vrot.slane %v260, 5
      %v263 = vsel %vm249, %v258, %v262
      %v265 = vshrl.u32 %v233, 16
      %v267 = vrot.slane %v265, 4
      %v268 = vshll.u32 %v233, 16
      %v270 = vrot.slane %v268, 5
      %v271 = vor.u32 %v267, %v270
      %v272 = vrot.slane %v271, 4
      %v274 = vshll.u32 %v234, 16
      %v276 = vrot.slane %v274, 5
      %v277 = vsel %vm249, %v272, %v276
      %v279 = vshrl.u32 %v235, 16
      %v281 = vrot.slane %v279, 4
      %v282 = vshll.u32 %v235, 16
      %v284 = vrot.slane %v282, 5
      %v285 = vor.u32 %v281, %v284
      %v286 = vrot.slane %v285, 4
      %v288 = vshll.u32 %v236, 16
      %v290 = vrot.slane %v288, 5
      %v291 = vsel %vm249, %v286, %v290
      %v293 = vshrl.u32 %v237, 16
      %v295 = vrot.slane %v293, 4
      %v296 = vshll.u32 %v237, 16
      %v298 = vrot.slane %v296, 5
      %v299 = vor.u32 %v295, %v298
      %v300 = vrot.slane %v299, 4
      %v302 = vshll.u32 %v238, 16
      %v304 = vrot.slane %v302, 5
      %v305 = vsel %vm249, %v300, %v304
      %v307 = vshrl.u32 %v239, 16
      %v309 = vrot.slane %v307, 4
      %v310 = vshll.u32 %v239, 16
      %v312 = vrot.slane %v310, 5
      %v313 = vor.u32 %v309, %v312
      %v314 = vrot.slane %v313, 4
      %v316 = vshll.u32 %v240, 16
      %v318 = vrot.slane %v316, 5
      %v319 = vsel %vm249, %v314, %v318
      %v321 = vshrl.u32 %v241, 16
      %v323 = vrot.slane %v321, 4
      %v324 = vshll.u32 %v241, 16
      %v326 = vrot.slane %v324, 5
      %v327 = vor.u32 %v323, %v326
      %v328 = vrot.slane %v327, 4
      %v330 = vshll.u32 %v242, 16
      %v332 = vrot.slane %v330, 5
      %v333 = vsel %vm249, %v328, %v332
      %v335 = vshrl.u32 %v243, 16
      %v337 = vrot.slane %v335, 4
      %v338 = vshll.u32 %v243, 16
      %v340 = vrot.slane %v338, 5
      %v341 = vor.u32 %v337, %v340
      %v342 = vrot.slane %v341, 4
      %v344 = vshll.u32 %v244, 16
      %v346 = vrot.slane %v344, 5
      %v347 = vsel %vm249, %v342, %v346
      %v349 = vshrl.u32 %v245, 16
      %v351 = vrot.slane %v349, 4
      %v352 = vshll.u32 %v245, 16
      %v354 = vrot.slane %v352, 5
      %v355 = vor.u32 %v351, %v354
      %v356 = vrot.slane %v355, 4
      %v358 = vshll.u32 %v246, 16
      %v360 = vrot.slane %v358, 5
      %v361 = vsel %vm249, %v356, %v360
      %s362 = scalar_lea.vmem %s1, 8
      %v363 = vld [vmem:[%s362] sm:$0xf]
      %v364 = vld [vmem:[%s362 + $0x4] sm:$0xf]
      %v365 = vunpack.c.l.b16 %v263
      %v366 = vunpack.c.l.b16 %v277
      %v367 = vunpack.c.l.b16 %v291
      %v368 = vunpack.c.l.b16 %v305
      %v369 = vunpack.c.l.b16 %v319
      %v370 = vunpack.c.l.b16 %v333
      %v371 = vunpack.c.l.b16 %v347
      %v372 = vunpack.c.l.b16 %v361
      %v373 = vpack.c.b16 %v366, %v365
      %v374 = vpack.c.b16 %v368, %v367
      %v375 = vpack.c.b16 %v370, %v369
      %v376 = vpack.c.b16 %v372, %v371
      %v379 = vunpack.c.l.b16 %v363
      %v380 = vunpack.c.l.b16 %v364
      %v381 = vpack.c.b16 %v380, %v379
      %vm383 = vcmask 130048
      %v385 = vsel %vm383, %v373, 0
      %v388 = vsel %vm383, %v374, 0
      %v391 = vsel %vm383, %v375, 0
      %v394 = vsel %vm383, %v376, 0
      %396 = vmatprep.subr.bf16.mxu0 0
      %397 = vmatpush1.bf16.msra.mxu0 %v381
      %398 = vmatprep.subr.bf16.mxu0 0
      %399 = vmatpush1.bf16.msra.mxu0 0
      %400 = vmatprep.subr.bf16.mxu0 0
      %401 = vmatpush1.bf16.msra.mxu0 0
      %402 = vmatprep.subr.bf16.mxu0 0
      %403 = vmatpush1.bf16.msra.mxu0 0
      %404 = vmatprep.subr.bf16.mxu0 0
      %405 = vmatpush1.bf16.msra.mxu0 0
      %406 = vmatprep.subr.bf16.mxu0 0
      %407 = vmatpush1.bf16.msra.mxu0 0
      %408 = vmatprep.subr.bf16.mxu0 0
      %409 = vmatpush1.bf16.msra.mxu0 0
      %410 = vmatprep.subr.bf16.mxu0 0
      %411 = vmatpush1.bf16.msra.mxu0 0
      %412 = vmatprep.subr.bf16.mxu0 0
      %413 = vmatpush1.bf16.msra.mxu0 0
      %414 = vmatprep.subr.bf16.mxu0 0
      %415 = vmatpush1.bf16.msra.mxu0 0
      %416 = vmatprep.subr.bf16.mxu0 0
      %417 = vmatpush1.bf16.msra.mxu0 0
      %418 = vmatprep.subr.bf16.mxu0 0
      %419 = vmatpush1.bf16.msra.mxu0 0
      %420 = vmatprep.subr.bf16.mxu0 0
      %421 = vmatpush1.bf16.msra.mxu0 0
      %422 = vmatprep.subr.bf16.mxu0 0
      %423 = vmatpush1.bf16.msra.mxu0 0
      %424 = vmatprep.subr.bf16.mxu0 0
      %425 = vmatpush1.bf16.msra.mxu0 0
      %426 = vmatprep.subr.bf16.mxu0 0
      %427 = vmatpush1.bf16.msra.mxu0 0
      %428 = vmatprep.mubr.bf16.mxu0 0
      %429 = vmatmul.mubr.bf16.gmra.mrb[0].mxu0 %v385
      %v430 = vpop.f32.mrb[0].mxu0
      %v431 = vadd.f32 0.0, %v430
      %v432 = vpop.f32.mrb[0].mxu0
      %v433 = vpop.f32.mrb[0].mxu0
      %v434 = vadd.f32 0.0, %v433
      %v435 = vpop.f32.mrb[0].mxu0
      %436 = vmatprep.mubr.bf16.mxu0 0
      %437 = vmatmul.mubr.bf16.gmra.mrb[0].mxu0 %v388
      %v438 = vpop.f32.mrb[0].mxu0
      %v439 = vadd.f32 0.0, %v438
      %v440 = vpop.f32.mrb[0].mxu0
      %v441 = vpop.f32.mrb[0].mxu0
      %v442 = vadd.f32 0.0, %v441
      %v443 = vpop.f32.mrb[0].mxu0
      %444 = vmatprep.mubr.bf16.mxu0 0
      %445 = vmatmul.mubr.bf16.gmra.mrb[0].mxu0 %v391
      %v446 = vpop.f32.mrb[0].mxu0
      %v447 = vadd.f32 0.0, %v446
      %v448 = vpop.f32.mrb[0].mxu0
      %v449 = vpop.f32.mrb[0].mxu0
      %v450 = vadd.f32 0.0, %v449
      %v451 = vpop.f32.mrb[0].mxu0
      %452 = vmatprep.mubr.bf16.mxu0 0
      %453 = vmatmul.mubr.bf16.gmra.mrb[0].mxu0 %v394
      %v454 = vpop.f32.mrb[0].mxu0
      %v455 = vadd.f32 0.0, %v454
      %v456 = vpop.f32.mrb[0].mxu0
      %v457 = vpop.f32.mrb[0].mxu0
      %v458 = vadd.f32 0.0, %v457
      %v459 = vpop.f32.mrb[0].mxu0
      %460 = vdwg.mxu0
      %v461 = vpack.c.b16 %v217, %v215
      %v462 = vpack.c.b16 %v221, %v219
      %v463 = vpack.c.b16 %v225, %v223
      %v464 = vpack.c.b16 %v229, %v227
      %v467 = vunpack.c.l.b16 %v205
      %v468 = vunpack.c.l.b16 %v206
      %v469 = vpack.c.b16 %v468, %v467
      %v472 = vsel %vm383, %v461, 0
      %v475 = vsel %vm383, %v462, 0
      %v478 = vsel %vm383, %v463, 0
      %v481 = vsel %vm383, %v464, 0
      %483 = vmatprep.subr.bf16.mxu0 0
      %484 = vmatpush1.bf16.msra.mxu0 %v469
      %485 = vmatprep.subr.bf16.mxu0 0
      %486 = vmatpush1.bf16.msra.mxu0 0
      %487 = vmatprep.subr.bf16.mxu0 0
      %488 = vmatpush1.bf16.msra.mxu0 0
      %489 = vmatprep.subr.bf16.mxu0 0
      %490 = vmatpush1.bf16.msra.mxu0 0
      %491 = vmatprep.subr.bf16.mxu0 0
      %492 = vmatpush1.bf16.msra.mxu0 0
      %493 = vmatprep.subr.bf16.mxu0 0
      %494 = vmatpush1.bf16.msra.mxu0 0
      %495 = vmatprep.subr.bf16.mxu0 0
      %496 = vmatpush1.bf16.msra.mxu0 0
      %497 = vmatprep.subr.bf16.mxu0 0
      %498 = vmatpush1.bf16.msra.mxu0 0
      %499 = vmatprep.subr.bf16.mxu0 0
      %500 = vmatpush1.bf16.msra.mxu0 0
      %501 = vmatprep.subr.bf16.mxu0 0
      %502 = vmatpush1.bf16.msra.mxu0 0
      %503 = vmatprep.subr.bf16.mxu0 0
      %504 = vmatpush1.bf16.msra.mxu0 0
      %505 = vmatprep.subr.bf16.mxu0 0
      %506 = vmatpush1.bf16.msra.mxu0 0
      %507 = vmatprep.subr.bf16.mxu0 0
      %508 = vmatpush1.bf16.msra.mxu0 0
      %509 = vmatprep.subr.bf16.mxu0 0
      %510 = vmatpush1.bf16.msra.mxu0 0
      %511 = vmatprep.subr.bf16.mxu0 0
      %512 = vmatpush1.bf16.msra.mxu0 0
      %513 = vmatprep.subr.bf16.mxu0 0
      %514 = vmatpush1.bf16.msra.mxu0 0
      %515 = vmatprep.mubr.bf16.mxu0 0
      %516 = vmatmul.mubr.bf16.gmra.mrb[0].mxu0 %v472
      %v517 = vpop.f32.mrb[0].mxu0
      %v518 = vadd.f32 %v431, %v517
      %v519 = vpop.f32.mrb[0].mxu0
      %v520 = vpop.f32.mrb[0].mxu0
      %v521 = vadd.f32 %v434, %v520
      %v522 = vpop.f32.mrb[0].mxu0
      %523 = vmatprep.mubr.bf16.mxu0 0
      %524 = vmatmul.mubr.bf16.gmra.mrb[0].mxu0 %v475
      %v525 = vpop.f32.mrb[0].mxu0
      %v526 = vadd.f32 %v439, %v525
      %v527 = vpop.f32.mrb[0].mxu0
      %v528 = vpop.f32.mrb[0].mxu0
      %v529 = vadd.f32 %v442, %v528
      %v530 = vpop.f32.mrb[0].mxu0
      %531 = vmatprep.mubr.bf16.mxu0 0
      %532 = vmatmul.mubr.bf16.gmra.mrb[0].mxu0 %v478
      %v533 = vpop.f32.mrb[0].mxu0
      %v534 = vadd.f32 %v447, %v533
      %v535 = vpop.f32.mrb[0].mxu0
      %v536 = vpop.f32.mrb[0].mxu0
      %v537 = vadd.f32 %v450, %v536
      %v538 = vpop.f32.mrb[0].mxu0
      %539 = vmatprep.mubr.bf16.mxu0 0
      %540 = vmatmul.mubr.bf16.gmra.mrb[0].mxu0 %v481
      %v541 = vpop.f32.mrb[0].mxu0
      %v542 = vadd.f32 %v455, %v541
      %v543 = vpop.f32.mrb[0].mxu0
      %v544 = vpop.f32.mrb[0].mxu0
      %v545 = vadd.f32 %v458, %v544
      %v546 = vpop.f32.mrb[0].mxu0
      %547 = vdwg.mxu0
      %vm548 = vcmask 1042432
      %vm549 = vcmask 1046532
      %vm550 = vmor %vm548, %vm549
      %v551 = vrot.slane %v231, 5
      %v552 = vrot.slane %v551, 4
      %v553 = vrot.slane %v232, 5
      %v554 = vsel %vm550, %v552, %v553
      %v555 = vrot.slane %v233, 5
      %v556 = vrot.slane %v555, 4
      %v557 = vrot.slane %v234, 5
      %v558 = vsel %vm550, %v556, %v557
      %v559 = vrot.slane %v235, 5
      %v560 = vrot.slane %v559, 4
      %v561 = vrot.slane %v236, 5
      %v562 = vsel %vm550, %v560, %v561
      %v563 = vrot.slane %v237, 5
      %v564 = vrot.slane %v563, 4
      %v565 = vrot.slane %v238, 5
      %v566 = vsel %vm550, %v564, %v565
      %v567 = vrot.slane %v239, 5
      %v568 = vrot.slane %v567, 4
      %v569 = vrot.slane %v240, 5
      %v570 = vsel %vm550, %v568, %v569
      %v571 = vrot.slane %v241, 5
      %v572 = vrot.slane %v571, 4
      %v573 = vrot.slane %v242, 5
      %v574 = vsel %vm550, %v572, %v573
      %v575 = vrot.slane %v243, 5
      %v576 = vrot.slane %v575, 4
      %v577 = vrot.slane %v244, 5
      %v578 = vsel %vm550, %v576, %v577
      %v579 = vrot.slane %v245, 5
      %v580 = vrot.slane %v579, 4
      %v581 = vrot.slane %v246, 5
      %v582 = vsel %vm550, %v580, %v581
      %s583 = scalar_lea.vmem %s1, 16
      %v584 = vld [vmem:[%s583] sm:$0xf]
      %v585 = vld [vmem:[%s583 + $0x4] sm:$0xf]
      %v586 = vunpack.c.l.b16 %v554
      %v587 = vunpack.c.l.b16 %v558
      %v588 = vunpack.c.l.b16 %v562
      %v589 = vunpack.c.l.b16 %v566
      %v590 = vunpack.c.l.b16 %v570
      %v591 = vunpack.c.l.b16 %v574
      %v592 = vunpack.c.l.b16 %v578
      %v593 = vunpack.c.l.b16 %v582
      %v594 = vpack.c.b16 %v587, %v586
      %v595 = vpack.c.b16 %v589, %v588
      %v596 = vpack.c.b16 %v591, %v590
      %v597 = vpack.c.b16 %v593, %v592
      %v600 = vunpack.c.l.b16 %v584
      %v601 = vunpack.c.l.b16 %v585
      %v602 = vpack.c.b16 %v601, %v600
      %v605 = vsel %vm383, %v594, 0
      %v608 = vsel %vm383, %v595, 0
      %v611 = vsel %vm383, %v596, 0
      %v614 = vsel %vm383, %v597, 0
      %616 = vmatprep.subr.bf16.mxu0 0
      %617 = vmatpush1.bf16.msra.mxu0 %v602
      %618 = vmatprep.subr.bf16.mxu0 0
      %619 = vmatpush1.bf16.msra.mxu0 0
      %620 = vmatprep.subr.bf16.mxu0 0
      %621 = vmatpush1.bf16.msra.mxu0 0
      %622 = vmatprep.subr.bf16.mxu0 0
      %623 = vmatpush1.bf16.msra.mxu0 0
      %624 = vmatprep.subr.bf16.mxu0 0
      %625 = vmatpush1.bf16.msra.mxu0 0
      %626 = vmatprep.subr.bf16.mxu0 0
      %627 = vmatpush1.bf16.msra.mxu0 0
      %628 = vmatprep.subr.bf16.mxu0 0
      %629 = vmatpush1.bf16.msra.mxu0 0
      %630 = vmatprep.subr.bf16.mxu0 0
      %631 = vmatpush1.bf16.msra.mxu0 0
      %632 = vmatprep.subr.bf16.mxu0 0
      %633 = vmatpush1.bf16.msra.mxu0 0
      %634 = vmatprep.subr.bf16.mxu0 0
      %635 = vmatpush1.bf16.msra.mxu0 0
      %636 = vmatprep.subr.bf16.mxu0 0
      %637 = vmatpush1.bf16.msra.mxu0 0
      %638 = vmatprep.subr.bf16.mxu0 0
      %639 = vmatpush1.bf16.msra.mxu0 0
      %640 = vmatprep.subr.bf16.mxu0 0
      %641 = vmatpush1.bf16.msra.mxu0 0
      %642 = vmatprep.subr.bf16.mxu0 0
      %643 = vmatpush1.bf16.msra.mxu0 0
      %644 = vmatprep.subr.bf16.mxu0 0
      %645 = vmatpush1.bf16.msra.mxu0 0
      %646 = vmatprep.subr.bf16.mxu0 0
      %647 = vmatpush1.bf16.msra.mxu0 0
      %648 = vmatprep.mubr.bf16.mxu0 0
      %649 = vmatmul.mubr.bf16.gmra.mrb[0].mxu0 %v605
      %v650 = vpop.f32.mrb[0].mxu0
      %v651 = vadd.f32 0.0, %v650
      %v652 = vpop.f32.mrb[0].mxu0
      %v653 = vpop.f32.mrb[0].mxu0
      %v654 = vadd.f32 0.0, %v653
      %v655 = vpop.f32.mrb[0].mxu0
      %656 = vmatprep.mubr.bf16.mxu0 0
      %657 = vmatmul.mubr.bf16.gmra.mrb[0].mxu0 %v608
      %v658 = vpop.f32.mrb[0].mxu0
      %v659 = vadd.f32 0.0, %v658
      %v660 = vpop.f32.mrb[0].mxu0
      %v661 = vpop.f32.mrb[0].mxu0
      %v662 = vadd.f32 0.0, %v661
      %v663 = vpop.f32.mrb[0].mxu0
      %664 = vmatprep.mubr.bf16.mxu0 0
      %665 = vmatmul.mubr.bf16.gmra.mrb[0].mxu0 %v611
      %v666 = vpop.f32.mrb[0].mxu0
      %v667 = vadd.f32 0.0, %v666
      %v668 = vpop.f32.mrb[0].mxu0
      %v669 = vpop.f32.mrb[0].mxu0
      %v670 = vadd.f32 0.0, %v669
      %v671 = vpop.f32.mrb[0].mxu0
      %672 = vmatprep.mubr.bf16.mxu0 0
      %673 = vmatmul.mubr.bf16.gmra.mrb[0].mxu0 %v614
      %v674 = vpop.f32.mrb[0].mxu0
      %v675 = vadd.f32 0.0, %v674
      %v676 = vpop.f32.mrb[0].mxu0
      %v677 = vpop.f32.mrb[0].mxu0
      %v678 = vadd.f32 0.0, %v677
      %v679 = vpop.f32.mrb[0].mxu0
      %680 = vdwg.mxu0
      %v681 = vadd.f32 %v518, %v651
      %v682 = vadd.f32 %v521, %v654
      %v683 = vadd.f32 %v526, %v659
      %v684 = vadd.f32 %v529, %v662
      %v685 = vadd.f32 %v534, %v667
      %v686 = vadd.f32 %v537, %v670
      %v687 = vadd.f32 %v542, %v675
      %v688 = vadd.f32 %v545, %v678
      %vm689 = vsmask.f32 2304
      %vm690 = vsmask.f32 6416
      %vm691 = vmor %vm689, %vm690
      %v692 = vrot.slane %v251, 5
      %v693 = vrot.slane %v254, 6
      %v694 = vor.u32 %v692, %v693
      %v695 = vrot.slane %v694, 4
      %v696 = vshrl.u32 %v232, 16
      %v698 = vrot.slane %v696, 5
      %v699 = vrot.slane %v260, 6
      %v700 = vor.u32 %v698, %v699
      %v701 = vsel %vm691, %v695, %v700
      %v702 = vrot.slane %v265, 5
      %v703 = vrot.slane %v268, 6
      %v704 = vor.u32 %v702, %v703
      %v705 = vrot.slane %v704, 4
      %v706 = vshrl.u32 %v234, 16
      %v708 = vrot.slane %v706, 5
      %v709 = vrot.slane %v274, 6
      %v710 = vor.u32 %v708, %v709
      %v711 = vsel %vm691, %v705, %v710
      %v712 = vrot.slane %v279, 5
      %v713 = vrot.slane %v282, 6
      %v714 = vor.u32 %v712, %v713
      %v715 = vrot.slane %v714, 4
      %v716 = vshrl.u32 %v236, 16
      %v718 = vrot.slane %v716, 5
      %v719 = vrot.slane %v288, 6
      %v720 = vor.u32 %v718, %v719
      %v721 = vsel %vm691, %v715, %v720
      %v722 = vrot.slane %v293, 5
      %v723 = vrot.slane %v296, 6
      %v724 = vor.u32 %v722, %v723
      %v725 = vrot.slane %v724, 4
      %v726 = vshrl.u32 %v238, 16
      %v728 = vrot.slane %v726, 5
      %v729 = vrot.slane %v302, 6
      %v730 = vor.u32 %v728, %v729
      %v731 = vsel %vm691, %v725, %v730
      %v732 = vrot.slane %v307, 5
      %v733 = vrot.slane %v310, 6
      %v734 = vor.u32 %v732, %v733
      %v735 = vrot.slane %v734, 4
      %v736 = vshrl.u32 %v240, 16
      %v738 = vrot.slane %v736, 5
      %v739 = vrot.slane %v316, 6
      %v740 = vor.u32 %v738, %v739
      %v741 = vsel %vm691, %v735, %v740
      %v742 = vrot.slane %v321, 5
      %v743 = vrot.slane %v324, 6
      %v744 = vor.u32 %v742, %v743
      %v745 = vrot.slane %v744, 4
      %v746 = vshrl.u32 %v242, 16
      %v748 = vrot.slane %v746, 5
      %v749 = vrot.slane %v330, 6
      %v750 = vor.u32 %v748, %v749
      %v751 = vsel %vm691, %v745, %v750
      %v752 = vrot.slane %v335, 5
      %v753 = vrot.slane %v338, 6
      %v754 = vor.u32 %v752, %v753
      %v755 = vrot.slane %v754, 4
      %v756 = vshrl.u32 %v244, 16
      %v758 = vrot.slane %v756, 5
      %v759 = vrot.slane %v344, 6
      %v760 = vor.u32 %v758, %v759
      %v761 = vsel %vm691, %v755, %v760
      %v762 = vrot.slane %v349, 5
      %v763 = vrot.slane %v352, 6
      %v764 = vor.u32 %v762, %v763
      %v765 = vrot.slane %v764, 4
      %v766 = vshrl.u32 %v246, 16
      %v768 = vrot.slane %v766, 5
      %v769 = vrot.slane %v358, 6
      %v770 = vor.u32 %v768, %v769
      %v771 = vsel %vm691, %v765, %v770
      %s772 = scalar_lea.vmem %s1, 24
      %v773 = vld [vmem:[%s772] sm:$0xf]
      %v774 = vld [vmem:[%s772 + $0x4] sm:$0xf]
      %v775 = vunpack.c.l.b16 %v701
      %v776 = vunpack.c.l.b16 %v711
      %v777 = vunpack.c.l.b16 %v721
      %v778 = vunpack.c.l.b16 %v731
      %v779 = vunpack.c.l.b16 %v741
      %v780 = vunpack.c.l.b16 %v751
      %v781 = vunpack.c.l.b16 %v761
      %v782 = vunpack.c.l.b16 %v771
      %v783 = vpack.c.b16 %v776, %v775
      %v784 = vpack.c.b16 %v778, %v777
      %v785 = vpack.c.b16 %v780, %v779
      %v786 = vpack.c.b16 %v782, %v781
      %v789 = vunpack.c.l.b16 %v773
      %v790 = vunpack.c.l.b16 %v774
      %v791 = vpack.c.b16 %v790, %v789
      %v794 = vsel %vm383, %v783, 0
      %v797 = vsel %vm383, %v784, 0
      %v800 = vsel %vm383, %v785, 0
      %v803 = vsel %vm383, %v786, 0
      %805 = vmatprep.subr.bf16.mxu0 0
      %806 = vmatpush1.bf16.msra.mxu0 %v791
      %807 = vmatprep.subr.bf16.mxu0 0
      %808 = vmatpush1.bf16.msra.mxu0 0
      %809 = vmatprep.subr.bf16.mxu0 0
      %810 = vmatpush1.bf16.msra.mxu0 0
      %811 = vmatprep.subr.bf16.mxu0 0
      %812 = vmatpush1.bf16.msra.mxu0 0
      %813 = vmatprep.subr.bf16.mxu0 0
      %814 = vmatpush1.bf16.msra.mxu0 0
      %815 = vmatprep.subr.bf16.mxu0 0
      %816 = vmatpush1.bf16.msra.mxu0 0
      %817 = vmatprep.subr.bf16.mxu0 0
      %818 = vmatpush1.bf16.msra.mxu0 0
      %819 = vmatprep.subr.bf16.mxu0 0
      %820 = vmatpush1.bf16.msra.mxu0 0
      %821 = vmatprep.subr.bf16.mxu0 0
      %822 = vmatpush1.bf16.msra.mxu0 0
      %823 = vmatprep.subr.bf16.mxu0 0
      %824 = vmatpush1.bf16.msra.mxu0 0
      %825 = vmatprep.subr.bf16.mxu0 0
      %826 = vmatpush1.bf16.msra.mxu0 0
      %827 = vmatprep.subr.bf16.mxu0 0
      %828 = vmatpush1.bf16.msra.mxu0 0
      %829 = vmatprep.subr.bf16.mxu0 0
      %830 = vmatpush1.bf16.msra.mxu0 0
      %831 = vmatprep.subr.bf16.mxu0 0
      %832 = vmatpush1.bf16.msra.mxu0 0
      %833 = vmatprep.subr.bf16.mxu0 0
      %834 = vmatpush1.bf16.msra.mxu0 0
      %835 = vmatprep.subr.bf16.mxu0 0
      %836 = vmatpush1.bf16.msra.mxu0 0
      %837 = vmatprep.mubr.bf16.mxu0 0
      %838 = vmatmul.mubr.bf16.gmra.mrb[0].mxu0 %v794
      %v839 = vpop.f32.mrb[0].mxu0
      %v840 = vadd.f32 0.0, %v839
      %v841 = vpop.f32.mrb[0].mxu0
      %v842 = vpop.f32.mrb[0].mxu0
      %v843 = vadd.f32 0.0, %v842
      %v844 = vpop.f32.mrb[0].mxu0
      %845 = vmatprep.mubr.bf16.mxu0 0
      %846 = vmatmul.mubr.bf16.gmra.mrb[0].mxu0 %v797
      %v847 = vpop.f32.mrb[0].mxu0
      %v848 = vadd.f32 0.0, %v847
      %v849 = vpop.f32.mrb[0].mxu0
      %v850 = vpop.f32.mrb[0].mxu0
      %v851 = vadd.f32 0.0, %v850
      %v852 = vpop.f32.mrb[0].mxu0
      %853 = vmatprep.mubr.bf16.mxu0 0
      %854 = vmatmul.mubr.bf16.gmra.mrb[0].mxu0 %v800
      %v855 = vpop.f32.mrb[0].mxu0
      %v856 = vadd.f32 0.0, %v855
      %v857 = vpop.f32.mrb[0].mxu0
      %v858 = vpop.f32.mrb[0].mxu0
      %v859 = vadd.f32 0.0, %v858
      %v860 = vpop.f32.mrb[0].mxu0
      %861 = vmatprep.mubr.bf16.mxu0 0
      %862 = vmatmul.mubr.bf16.gmra.mrb[0].mxu0 %v803
      %v863 = vpop.f32.mrb[0].mxu0
      %v864 = vadd.f32 0.0, %v863
      %v865 = vpop.f32.mrb[0].mxu0
      %v866 = vpop.f32.mrb[0].mxu0
      %v867 = vadd.f32 0.0, %v866
      %v868 = vpop.f32.mrb[0].mxu0
      %869 = vdwg.mxu0
      %v870 = vadd.f32 %v681, %v840
      %v871 = vadd.f32 %v682, %v843
      %v872 = vadd.f32 %v683, %v848
      %v873 = vadd.f32 %v684, %v851
      %v874 = vadd.f32 %v685, %v856
      %v875 = vadd.f32 %v686, %v859
      %v876 = vadd.f32 %v687, %v864
      %v877 = vadd.f32 %v688, %v867
      %s878 = scalar_lea.vmem %s1, 32
      %v879 = vld [vmem:[%s878] sm:$0xf]
      %v880 = vld [vmem:[%s878 + $0x4] sm:$0xf]
      %v882 = vunpack.c.l.b16 %v202
      %v883 = vpack.c.b16 %v219, %v217
      %v884 = vpack.c.b16 %v223, %v221
      %v885 = vpack.c.b16 %v227, %v225
      %v886 = vpack.c.b16 %v882, %v229
      %v889 = vunpack.c.l.b16 %v879
      %v890 = vunpack.c.l.b16 %v880
      %v891 = vpack.c.b16 %v890, %v889
      %v894 = vsel %vm383, %v883, 0
      %v897 = vsel %vm383, %v884, 0
      %v900 = vsel %vm383, %v885, 0
      %v903 = vsel %vm383, %v886, 0
      %905 = vmatprep.subr.bf16.mxu0 0
      %906 = vmatpush1.bf16.msra.mxu0 %v891
      %907 = vmatprep.subr.bf16.mxu0 0
      %908 = vmatpush1.bf16.msra.mxu0 0
      %909 = vmatprep.subr.bf16.mxu0 0
      %910 = vmatpush1.bf16.msra.mxu0 0
      %911 = vmatprep.subr.bf16.mxu0 0
      %912 = vmatpush1.bf16.msra.mxu0 0
      %913 = vmatprep.subr.bf16.mxu0 0
      %914 = vmatpush1.bf16.msra.mxu0 0
      %915 = vmatprep.subr.bf16.mxu0 0
      %916 = vmatpush1.bf16.msra.mxu0 0
      %917 = vmatprep.subr.bf16.mxu0 0
      %918 = vmatpush1.bf16.msra.mxu0 0
      %919 = vmatprep.subr.bf16.mxu0 0
      %920 = vmatpush1.bf16.msra.mxu0 0
      %921 = vmatprep.subr.bf16.mxu0 0
      %922 = vmatpush1.bf16.msra.mxu0 0
      %923 = vmatprep.subr.bf16.mxu0 0
      %924 = vmatpush1.bf16.msra.mxu0 0
      %925 = vmatprep.subr.bf16.mxu0 0
      %926 = vmatpush1.bf16.msra.mxu0 0
      %927 = vmatprep.subr.bf16.mxu0 0
      %928 = vmatpush1.bf16.msra.mxu0 0
      %929 = vmatprep.subr.bf16.mxu0 0
      %930 = vmatpush1.bf16.msra.mxu0 0
      %931 = vmatprep.subr.bf16.mxu0 0
      %932 = vmatpush1.bf16.msra.mxu0 0
      %933 = vmatprep.subr.bf16.mxu0 0
      %934 = vmatpush1.bf16.msra.mxu0 0
      %935 = vmatprep.subr.bf16.mxu0 0
      %936 = vmatpush1.bf16.msra.mxu0 0
      %937 = vmatprep.mubr.bf16.mxu0 0
      %938 = vmatmul.mubr.bf16.gmra.mrb[0].mxu0 %v894
      %v939 = vpop.f32.mrb[0].mxu0
      %v940 = vadd.f32 0.0, %v939
      %v941 = vpop.f32.mrb[0].mxu0
      %v942 = vpop.f32.mrb[0].mxu0
      %v943 = vadd.f32 0.0, %v942
      %v944 = vpop.f32.mrb[0].mxu0
      %945 = vmatprep.mubr.bf16.mxu0 0
      %946 = vmatmul.mubr.bf16.gmra.mrb[0].mxu0 %v897
      %v947 = vpop.f32.mrb[0].mxu0
      %v948 = vadd.f32 0.0, %v947
      %v949 = vpop.f32.mrb[0].mxu0
      %v950 = vpop.f32.mrb[0].mxu0
      %v951 = vadd.f32 0.0, %v950
      %v952 = vpop.f32.mrb[0].mxu0
      %953 = vmatprep.mubr.bf16.mxu0 0
      %954 = vmatmul.mubr.bf16.gmra.mrb[0].mxu0 %v900
      %v955 = vpop.f32.mrb[0].mxu0
      %v956 = vadd.f32 0.0, %v955
      %v957 = vpop.f32.mrb[0].mxu0
      %v958 = vpop.f32.mrb[0].mxu0
      %v959 = vadd.f32 0.0, %v958
      %v960 = vpop.f32.mrb[0].mxu0
      %961 = vmatprep.mubr.bf16.mxu0 0
      %962 = vmatmul.mubr.bf16.gmra.mrb[0].mxu0 %v903
      %v963 = vpop.f32.mrb[0].mxu0
      %v964 = vadd.f32 0.0, %v963
      %v965 = vpop.f32.mrb[0].mxu0
      %v966 = vpop.f32.mrb[0].mxu0
      %v967 = vadd.f32 0.0, %v966
      %v968 = vpop.f32.mrb[0].mxu0
      %969 = vdwg.mxu0
      %v970 = vadd.f32 %v870, %v940
      %v971 = vadd.f32 %v871, %v943
      %v972 = vadd.f32 %v872, %v948
      %v973 = vadd.f32 %v873, %v951
      %v974 = vadd.f32 %v874, %v956
      %v975 = vadd.f32 %v875, %v959
      %v976 = vadd.f32 %v876, %v964
      %v977 = vadd.f32 %v877, %v967
      %v978 = vunpack.c.h.b16 %v202
      %v979 = vpack.c.b16 %v882, %v882
      %v980 = vpack.c.b16 %v978, %v978
      %v982 = vshrl.u32 %v979, 16
      %v984 = vrot.slane %v982, 4
      %v985 = vshll.u32 %v979, 16
      %v987 = vrot.slane %v985, 5
      %v988 = vor.u32 %v984, %v987
      %v989 = vrot.slane %v988, 4
      %v991 = vshll.u32 %v980, 16
      %v993 = vrot.slane %v991, 5
      %v994 = vsel %vm249, %v989, %v993
      %s995 = scalar_lea.vmem %s1, 40
      %v996 = vld [vmem:[%s995] sm:$0xf]
      %v997 = vld [vmem:[%s995 + $0x4] sm:$0xf]
      %v998 = vunpack.c.l.b16 %v994
      %v999 = vpack.c.b16 %v367, %v366
      %v1000 = vpack.c.b16 %v369, %v368
      %v1001 = vpack.c.b16 %v371, %v370
      %v1002 = vpack.c.b16 %v998, %v372
      %v1005 = vunpack.c.l.b16 %v996
      %v1006 = vunpack.c.l.b16 %v997
      %v1007 = vpack.c.b16 %v1006, %v1005
      %v1010 = vsel %vm383, %v999, 0
      %v1013 = vsel %vm383, %v1000, 0
      %v1016 = vsel %vm383, %v1001, 0
      %v1019 = vsel %vm383, %v1002, 0
      %1021 = vmatprep.subr.bf16.mxu0 0
      %1022 = vmatpush1.bf16.msra.mxu0 %v1007
      %1023 = vmatprep.subr.bf16.mxu0 0
      %1024 = vmatpush1.bf16.msra.mxu0 0
      %1025 = vmatprep.subr.bf16.mxu0 0
      %1026 = vmatpush1.bf16.msra.mxu0 0
      %1027 = vmatprep.subr.bf16.mxu0 0
      %1028 = vmatpush1.bf16.msra.mxu0 0
      %1029 = vmatprep.subr.bf16.mxu0 0
      %1030 = vmatpush1.bf16.msra.mxu0 0
      %1031 = vmatprep.subr.bf16.mxu0 0
      %1032 = vmatpush1.bf16.msra.mxu0 0
      %1033 = vmatprep.subr.bf16.mxu0 0
      %1034 = vmatpush1.bf16.msra.mxu0 0
      %1035 = vmatprep.subr.bf16.mxu0 0
      %1036 = vmatpush1.bf16.msra.mxu0 0
      %1037 = vmatprep.subr.bf16.mxu0 0
      %1038 = vmatpush1.bf16.msra.mxu0 0
      %1039 = vmatprep.subr.bf16.mxu0 0
      %1040 = vmatpush1.bf16.msra.mxu0 0
      %1041 = vmatprep.subr.bf16.mxu0 0
      %1042 = vmatpush1.bf16.msra.mxu0 0
      %1043 = vmatprep.subr.bf16.mxu0 0
      %1044 = vmatpush1.bf16.msra.mxu0 0
      %1045 = vmatprep.subr.bf16.mxu0 0
      %1046 = vmatpush1.bf16.msra.mxu0 0
      %1047 = vmatprep.subr.bf16.mxu0 0
      %1048 = vmatpush1.bf16.msra.mxu0 0
      %1049 = vmatprep.subr.bf16.mxu0 0
      %1050 = vmatpush1.bf16.msra.mxu0 0
      %1051 = vmatprep.subr.bf16.mxu0 0
      %1052 = vmatpush1.bf16.msra.mxu0 0
      %1053 = vmatprep.mubr.bf16.mxu0 0
      %1054 = vmatmul.mubr.bf16.gmra.mrb[0].mxu0 %v1010
      %v1055 = vpop.f32.mrb[0].mxu0
      %v1056 = vadd.f32 0.0, %v1055
      %v1057 = vpop.f32.mrb[0].mxu0
      %v1058 = vpop.f32.mrb[0].mxu0
      %v1059 = vadd.f32 0.0, %v1058
      %v1060 = vpop.f32.mrb[0].mxu0
      %1061 = vmatprep.mubr.bf16.mxu0 0
      %1062 = vmatmul.mubr.bf16.gmra.mrb[0].mxu0 %v1013
      %v1063 = vpop.f32.mrb[0].mxu0
      %v1064 = vadd.f32 0.0, %v1063
      %v1065 = vpop.f32.mrb[0].mxu0
      %v1066 = vpop.f32.mrb[0].mxu0
      %v1067 = vadd.f32 0.0, %v1066
      %v1068 = vpop.f32.mrb[0].mxu0
      %1069 = vmatprep.mubr.bf16.mxu0 0
      %1070 = vmatmul.mubr.bf16.gmra.mrb[0].mxu0 %v1016
      %v1071 = vpop.f32.mrb[0].mxu0
      %v1072 = vadd.f32 0.0, %v1071
      %v1073 = vpop.f32.mrb[0].mxu0
      %v1074 = vpop.f32.mrb[0].mxu0
      %v1075 = vadd.f32 0.0, %v1074
      %v1076 = vpop.f32.mrb[0].mxu0
      %1077 = vmatprep.mubr.bf16.mxu0 0
      %1078 = vmatmul.mubr.bf16.gmra.mrb[0].mxu0 %v1019
      %v1079 = vpop.f32.mrb[0].mxu0
      %v1080 = vadd.f32 0.0, %v1079
      %v1081 = vpop.f32.mrb[0].mxu0
      %v1082 = vpop.f32.mrb[0].mxu0
      %v1083 = vadd.f32 0.0, %v1082
      %v1084 = vpop.f32.mrb[0].mxu0
      %1085 = vdwg.mxu0
      %v1086 = vadd.f32 %v970, %v1056
      %v1087 = vadd.f32 %v971, %v1059
      %v1088 = vadd.f32 %v972, %v1064
      %v1089 = vadd.f32 %v973, %v1067
      %v1090 = vadd.f32 %v974, %v1072
      %v1091 = vadd.f32 %v975, %v1075
      %v1092 = vadd.f32 %v976, %v1080
      %v1093 = vadd.f32 %v977, %v1083
      %v1094 = vrot.slane %v979, 5
      %v1095 = vrot.slane %v1094, 4
      %v1096 = vrot.slane %v980, 5
      %v1097 = vsel %vm550, %v1095, %v1096
      %s1098 = scalar_lea.vmem %s1, 48
      %v1099 = vld [vmem:[%s1098] sm:$0xf]
      %v1100 = vld [vmem:[%s1098 + $0x4] sm:$0xf]
      %v1101 = vunpack.c.l.b16 %v1097
      %v1102 = vpack.c.b16 %v588, %v587
      %v1103 = vpack.c.b16 %v590, %v589
      %v1104 = vpack.c.b16 %v592, %v591
      %v1105 = vpack.c.b16 %v1101, %v593
      %v1108 = vunpack.c.l.b16 %v1099
      %v1109 = vunpack.c.l.b16 %v1100
      %v1110 = vpack.c.b16 %v1109, %v1108
      %v1113 = vsel %vm383, %v1102, 0
      %v1116 = vsel %vm383, %v1103, 0
      %v1119 = vsel %vm383, %v1104, 0
      %v1122 = vsel %vm383, %v1105, 0
      %1124 = vmatprep.subr.bf16.mxu0 0
      %1125 = vmatpush1.bf16.msra.mxu0 %v1110
      %1126 = vmatprep.subr.bf16.mxu0 0
      %1127 = vmatpush1.bf16.msra.mxu0 0
      %1128 = vmatprep.subr.bf16.mxu0 0
      %1129 = vmatpush1.bf16.msra.mxu0 0
      %1130 = vmatprep.subr.bf16.mxu0 0
      %1131 = vmatpush1.bf16.msra.mxu0 0
      %1132 = vmatprep.subr.bf16.mxu0 0
      %1133 = vmatpush1.bf16.msra.mxu0 0
      %1134 = vmatprep.subr.bf16.mxu0 0
      %1135 = vmatpush1.bf16.msra.mxu0 0
      %1136 = vmatprep.subr.bf16.mxu0 0
      %1137 = vmatpush1.bf16.msra.mxu0 0
      %1138 = vmatprep.subr.bf16.mxu0 0
      %1139 = vmatpush1.bf16.msra.mxu0 0
      %1140 = vmatprep.subr.bf16.mxu0 0
      %1141 = vmatpush1.bf16.msra.mxu0 0
      %1142 = vmatprep.subr.bf16.mxu0 0
      %1143 = vmatpush1.bf16.msra.mxu0 0
      %1144 = vmatprep.subr.bf16.mxu0 0
      %1145 = vmatpush1.bf16.msra.mxu0 0
      %1146 = vmatprep.subr.bf16.mxu0 0
      %1147 = vmatpush1.bf16.msra.mxu0 0
      %1148 = vmatprep.subr.bf16.mxu0 0
      %1149 = vmatpush1.bf16.msra.mxu0 0
      %1150 = vmatprep.subr.bf16.mxu0 0
      %1151 = vmatpush1.bf16.msra.mxu0 0
      %1152 = vmatprep.subr.bf16.mxu0 0
      %1153 = vmatpush1.bf16.msra.mxu0 0
      %1154 = vmatprep.subr.bf16.mxu0 0
      %1155 = vmatpush1.bf16.msra.mxu0 0
      %1156 = vmatprep.mubr.bf16.mxu0 0
      %1157 = vmatmul.mubr.bf16.gmra.mrb[0].mxu0 %v1113
      %v1158 = vpop.f32.mrb[0].mxu0
      %v1159 = vadd.f32 0.0, %v1158
      %v1160 = vpop.f32.mrb[0].mxu0
      %v1161 = vpop.f32.mrb[0].mxu0
      %v1162 = vadd.f32 0.0, %v1161
      %v1163 = vpop.f32.mrb[0].mxu0
      %1164 = vmatprep.mubr.bf16.mxu0 0
      %1165 = vmatmul.mubr.bf16.gmra.mrb[0].mxu0 %v1116
      %v1166 = vpop.f32.mrb[0].mxu0
      %v1167 = vadd.f32 0.0, %v1166
      %v1168 = vpop.f32.mrb[0].mxu0
      %v1169 = vpop.f32.mrb[0].mxu0
      %v1170 = vadd.f32 0.0, %v1169
      %v1171 = vpop.f32.mrb[0].mxu0
      %1172 = vmatprep.mubr.bf16.mxu0 0
      %1173 = vmatmul.mubr.bf16.gmra.mrb[0].mxu0 %v1119
      %v1174 = vpop.f32.mrb[0].mxu0
      %v1175 = vadd.f32 0.0, %v1174
      %v1176 = vpop.f32.mrb[0].mxu0
      %v1177 = vpop.f32.mrb[0].mxu0
      %v1178 = vadd.f32 0.0, %v1177
      %v1179 = vpop.f32.mrb[0].mxu0
      %1180 = vmatprep.mubr.bf16.mxu0 0
      %1181 = vmatmul.mubr.bf16.gmra.mrb[0].mxu0 %v1122
      %v1182 = vpop.f32.mrb[0].mxu0
      %v1183 = vadd.f32 0.0, %v1182
      %v1184 = vpop.f32.mrb[0].mxu0
      %v1185 = vpop.f32.mrb[0].mxu0
      %v1186 = vadd.f32 0.0, %v1185
      %v1187 = vpop.f32.mrb[0].mxu0
      %1188 = vdwg.mxu0
      %v1189 = vadd.f32 %v1086, %v1159
      %v1190 = vadd.f32 %v1087, %v1162
      %v1191 = vadd.f32 %v1088, %v1167
      %v1192 = vadd.f32 %v1089, %v1170
      %v1193 = vadd.f32 %v1090, %v1175
      %v1194 = vadd.f32 %v1091, %v1178
      %v1195 = vadd.f32 %v1092, %v1183
      %v1196 = vadd.f32 %v1093, %v1186
      %v1197 = vrot.slane %v982, 5
      %v1198 = vrot.slane %v985, 6
      %v1199 = vor.u32 %v1197, %v1198
      %v1200 = vrot.slane %v1199, 4
      %v1201 = vshrl.u32 %v980, 16
      %v1203 = vrot.slane %v1201, 5
      %v1204 = vrot.slane %v991, 6
      %v1205 = vor.u32 %v1203, %v1204
      %v1206 = vsel %vm691, %v1200, %v1205
      %s1207 = scalar_lea.vmem %s1, 56
      %v1208 = vld [vmem:[%s1207] sm:$0xf]
      %v1209 = vld [vmem:[%s1207 + $0x4] sm:$0xf]
      %v1210 = vunpack.c.l.b16 %v1206
      %v1211 = vpack.c.b16 %v777, %v776
      %v1212 = vpack.c.b16 %v779, %v778
      %v1213 = vpack.c.b16 %v781, %v780
      %v1214 = vpack.c.b16 %v1210, %v782
      %v1217 = vunpack.c.l.b16 %v1208
      %v1218 = vunpack.c.l.b16 %v1209
      %v1219 = vpack.c.b16 %v1218, %v1217
      %v1222 = vsel %vm383, %v1211, 0
      %v1225 = vsel %vm383, %v1212, 0
      %v1228 = vsel %vm383, %v1213, 0
      %v1231 = vsel %vm383, %v1214, 0
      %1233 = vmatprep.subr.bf16.mxu0 0
      %1234 = vmatpush1.bf16.msra.mxu0 %v1219
      %1235 = vmatprep.subr.bf16.mxu0 0
      %1236 = vmatpush1.bf16.msra.mxu0 0
      %1237 = vmatprep.subr.bf16.mxu0 0
      %1238 = vmatpush1.bf16.msra.mxu0 0
      %1239 = vmatprep.subr.bf16.mxu0 0
      %1240 = vmatpush1.bf16.msra.mxu0 0
      %1241 = vmatprep.subr.bf16.mxu0 0
      %1242 = vmatpush1.bf16.msra.mxu0 0
      %1243 = vmatprep.subr.bf16.mxu0 0
      %1244 = vmatpush1.bf16.msra.mxu0 0
      %1245 = vmatprep.subr.bf16.mxu0 0
      %1246 = vmatpush1.bf16.msra.mxu0 0
      %1247 = vmatprep.subr.bf16.mxu0 0
      %1248 = vmatpush1.bf16.msra.mxu0 0
      %1249 = vmatprep.subr.bf16.mxu0 0
      %1250 = vmatpush1.bf16.msra.mxu0 0
      %1251 = vmatprep.subr.bf16.mxu0 0
      %1252 = vmatpush1.bf16.msra.mxu0 0
      %1253 = vmatprep.subr.bf16.mxu0 0
      %1254 = vmatpush1.bf16.msra.mxu0 0
      %1255 = vmatprep.subr.bf16.mxu0 0
      %1256 = vmatpush1.bf16.msra.mxu0 0
      %1257 = vmatprep.subr.bf16.mxu0 0
      %1258 = vmatpush1.bf16.msra.mxu0 0
      %1259 = vmatprep.subr.bf16.mxu0 0
      %1260 = vmatpush1.bf16.msra.mxu0 0
      %1261 = vmatprep.subr.bf16.mxu0 0
      %1262 = vmatpush1.bf16.msra.mxu0 0
      %1263 = vmatprep.subr.bf16.mxu0 0
      %1264 = vmatpush1.bf16.msra.mxu0 0
      %1265 = vmatprep.mubr.bf16.mxu0 0
      %1266 = vmatmul.mubr.bf16.gmra.mrb[0].mxu0 %v1222
      %v1267 = vpop.f32.mrb[0].mxu0
      %v1268 = vadd.f32 0.0, %v1267
      %v1269 = vpop.f32.mrb[0].mxu0
      %v1270 = vpop.f32.mrb[0].mxu0
      %v1271 = vadd.f32 0.0, %v1270
      %v1272 = vpop.f32.mrb[0].mxu0
      %1273 = vmatprep.mubr.bf16.mxu0 0
      %1274 = vmatmul.mubr.bf16.gmra.mrb[0].mxu0 %v1225
      %v1275 = vpop.f32.mrb[0].mxu0
      %v1276 = vadd.f32 0.0, %v1275
      %v1277 = vpop.f32.mrb[0].mxu0
      %v1278 = vpop.f32.mrb[0].mxu0
      %v1279 = vadd.f32 0.0, %v1278
      %v1280 = vpop.f32.mrb[0].mxu0
      %1281 = vmatprep.mubr.bf16.mxu0 0
      %1282 = vmatmul.mubr.bf16.gmra.mrb[0].mxu0 %v1228
      %v1283 = vpop.f32.mrb[0].mxu0
      %v1284 = vadd.f32 0.0, %v1283
      %v1285 = vpop.f32.mrb[0].mxu0
      %v1286 = vpop.f32.mrb[0].mxu0
      %v1287 = vadd.f32 0.0, %v1286
      %v1288 = vpop.f32.mrb[0].mxu0
      %1289 = vmatprep.mubr.bf16.mxu0 0
      %1290 = vmatmul.mubr.bf16.gmra.mrb[0].mxu0 %v1231
      %v1291 = vpop.f32.mrb[0].mxu0
      %v1292 = vadd.f32 0.0, %v1291
      %v1293 = vpop.f32.mrb[0].mxu0
      %v1294 = vpop.f32.mrb[0].mxu0
      %v1295 = vadd.f32 0.0, %v1294
      %v1296 = vpop.f32.mrb[0].mxu0
      %1297 = vdwg.mxu0
      %v1298 = vadd.f32 %v1189, %v1268
      %v1299 = vadd.f32 %v1190, %v1271
      %v1300 = vadd.f32 %v1191, %v1276
      %v1301 = vadd.f32 %v1192, %v1279
      %v1302 = vadd.f32 %v1193, %v1284
      %v1303 = vadd.f32 %v1194, %v1287
      %v1304 = vadd.f32 %v1195, %v1292
      %v1305 = vadd.f32 %v1196, %v1295
      %s1306 = scalar_lea.vmem %s1, 64
      %v1307 = vld [vmem:[%s1306] sm:$0xf]
      %v1308 = vld [vmem:[%s1306 + $0x4] sm:$0xf]
      %v1310 = vunpack.c.l.b16 %v203
      %v1311 = vpack.c.b16 %v1310, %v882
      %v1314 = vunpack.c.l.b16 %v1307
      %v1315 = vunpack.c.l.b16 %v1308
      %v1316 = vpack.c.b16 %v1315, %v1314
      %v1319 = vsel %vm383, %v1311, 0
      %1321 = vmatprep.subr.bf16.mxu0 0
      %1322 = vmatpush1.bf16.msra.mxu0 %v1316
      %1323 = vmatprep.subr.bf16.mxu0 0
      %1324 = vmatpush1.bf16.msra.mxu0 0
      %1325 = vmatprep.subr.bf16.mxu0 0
      %1326 = vmatpush1.bf16.msra.mxu0 0
      %1327 = vmatprep.subr.bf16.mxu0 0
      %1328 = vmatpush1.bf16.msra.mxu0 0
      %1329 = vmatprep.subr.bf16.mxu0 0
      %1330 = vmatpush1.bf16.msra.mxu0 0
      %1331 = vmatprep.subr.bf16.mxu0 0
      %1332 = vmatpush1.bf16.msra.mxu0 0
      %1333 = vmatprep.subr.bf16.mxu0 0
      %1334 = vmatpush1.bf16.msra.mxu0 0
      %1335 = vmatprep.subr.bf16.mxu0 0
      %1336 = vmatpush1.bf16.msra.mxu0 0
      %1337 = vmatprep.subr.bf16.mxu0 0
      %1338 = vmatpush1.bf16.msra.mxu0 0
      %1339 = vmatprep.subr.bf16.mxu0 0
      %1340 = vmatpush1.bf16.msra.mxu0 0
      %1341 = vmatprep.subr.bf16.mxu0 0
      %1342 = vmatpush1.bf16.msra.mxu0 0
      %1343 = vmatprep.subr.bf16.mxu0 0
      %1344 = vmatpush1.bf16.msra.mxu0 0
      %1345 = vmatprep.subr.bf16.mxu0 0
      %1346 = vmatpush1.bf16.msra.mxu0 0
      %1347 = vmatprep.subr.bf16.mxu0 0
      %1348 = vmatpush1.bf16.msra.mxu0 0
      %1349 = vmatprep.subr.bf16.mxu0 0
      %1350 = vmatpush1.bf16.msra.mxu0 0
      %1351 = vmatprep.subr.bf16.mxu0 0
      %1352 = vmatpush1.bf16.msra.mxu0 0
      %1353 = vmatprep.mubr.bf16.mxu0 0
      %1354 = vmatmul.mubr.bf16.gmra.mrb[0].mxu0 %v475
      %v1355 = vpop.f32.mrb[0].mxu0
      %v1356 = vadd.f32 0.0, %v1355
      %v1357 = vpop.f32.mrb[0].mxu0
      %v1358 = vpop.f32.mrb[0].mxu0
      %v1359 = vadd.f32 0.0, %v1358
      %v1360 = vpop.f32.mrb[0].mxu0
      %1361 = vmatprep.mubr.bf16.mxu0 0
      %1362 = vmatmul.mubr.bf16.gmra.mrb[0].mxu0 %v478
      %v1363 = vpop.f32.mrb[0].mxu0
      %v1364 = vadd.f32 0.0, %v1363
      %v1365 = vpop.f32.mrb[0].mxu0
      %v1366 = vpop.f32.mrb[0].mxu0
      %v1367 = vadd.f32 0.0, %v1366
      %v1368 = vpop.f32.mrb[0].mxu0
      %1369 = vmatprep.mubr.bf16.mxu0 0
      %1370 = vmatmul.mubr.bf16.gmra.mrb[0].mxu0 %v481
      %v1371 = vpop.f32.mrb[0].mxu0
      %v1372 = vadd.f32 0.0, %v1371
      %v1373 = vpop.f32.mrb[0].mxu0
      %v1374 = vpop.f32.mrb[0].mxu0
      %v1375 = vadd.f32 0.0, %v1374
      %v1376 = vpop.f32.mrb[0].mxu0
      %1377 = vmatprep.mubr.bf16.mxu0 0
      %1378 = vmatmul.mubr.bf16.gmra.mrb[0].mxu0 %v1319
      %v1379 = vpop.f32.mrb[0].mxu0
      %v1380 = vadd.f32 0.0, %v1379
      %v1381 = vpop.f32.mrb[0].mxu0
      %v1382 = vpop.f32.mrb[0].mxu0
      %v1383 = vadd.f32 0.0, %v1382
      %v1384 = vpop.f32.mrb[0].mxu0
      %1385 = vdwg.mxu0
      %v1386 = vadd.f32 %v1298, %v1356
      %v1387 = vadd.f32 %v1299, %v1359
      %v1388 = vadd.f32 %v1300, %v1364
      %v1389 = vadd.f32 %v1301, %v1367
      %v1390 = vadd.f32 %v1302, %v1372
      %v1391 = vadd.f32 %v1303, %v1375
      %v1392 = vadd.f32 %v1304, %v1380
      %v1393 = vadd.f32 %v1305, %v1383
      %v1394 = vunpack.c.h.b16 %v203
      %v1395 = vpack.c.b16 %v1310, %v1310
      %v1396 = vpack.c.b16 %v1394, %v1394
      %v1398 = vshrl.u32 %v1395, 16
      %v1400 = vrot.slane %v1398, 4
      %v1401 = vshll.u32 %v1395, 16
      %v1403 = vrot.slane %v1401, 5
      %v1404 = vor.u32 %v1400, %v1403
      %v1405 = vrot.slane %v1404, 4
      %v1407 = vshll.u32 %v1396, 16
      %v1409 = vrot.slane %v1407, 5
      %v1410 = vsel %vm249, %v1405, %v1409
      %s1411 = scalar_lea.vmem %s1, 72
      %v1412 = vld [vmem:[%s1411] sm:$0xf]
      %v1413 = vld [vmem:[%s1411 + $0x4] sm:$0xf]
      %v1414 = vunpack.c.l.b16 %v1410
      %v1415 = vpack.c.b16 %v1414, %v998
      %v1418 = vunpack.c.l.b16 %v1412
      %v1419 = vunpack.c.l.b16 %v1413
      %v1420 = vpack.c.b16 %v1419, %v1418
      %v1423 = vsel %vm383, %v1415, 0
      %1425 = vmatprep.subr.bf16.mxu0 0
      %1426 = vmatpush1.bf16.msra.mxu0 %v1420
      %1427 = vmatprep.subr.bf16.mxu0 0
      %1428 = vmatpush1.bf16.msra.mxu0 0
      %1429 = vmatprep.subr.bf16.mxu0 0
      %1430 = vmatpush1.bf16.msra.mxu0 0
      %1431 = vmatprep.subr.bf16.mxu0 0
      %1432 = vmatpush1.bf16.msra.mxu0 0
      %1433 = vmatprep.subr.bf16.mxu0 0
      %1434 = vmatpush1.bf16.msra.mxu0 0
      %1435 = vmatprep.subr.bf16.mxu0 0
      %1436 = vmatpush1.bf16.msra.mxu0 0
      %1437 = vmatprep.subr.bf16.mxu0 0
      %1438 = vmatpush1.bf16.msra.mxu0 0
      %1439 = vmatprep.subr.bf16.mxu0 0
      %1440 = vmatpush1.bf16.msra.mxu0 0
      %1441 = vmatprep.subr.bf16.mxu0 0
      %1442 = vmatpush1.bf16.msra.mxu0 0
      %1443 = vmatprep.subr.bf16.mxu0 0
      %1444 = vmatpush1.bf16.msra.mxu0 0
      %1445 = vmatprep.subr.bf16.mxu0 0
      %1446 = vmatpush1.bf16.msra.mxu0 0
      %1447 = vmatprep.subr.bf16.mxu0 0
      %1448 = vmatpush1.bf16.msra.mxu0 0
      %1449 = vmatprep.subr.bf16.mxu0 0
      %1450 = vmatpush1.bf16.msra.mxu0 0
      %1451 = vmatprep.subr.bf16.mxu0 0
      %1452 = vmatpush1.bf16.msra.mxu0 0
      %1453 = vmatprep.subr.bf16.mxu0 0
      %1454 = vmatpush1.bf16.msra.mxu0 0
      %1455 = vmatprep.subr.bf16.mxu0 0
      %1456 = vmatpush1.bf16.msra.mxu0 0
      %1457 = vmatprep.mubr.bf16.mxu0 0
      %1458 = vmatmul.mubr.bf16.gmra.mrb[0].mxu0 %v388
      %v1459 = vpop.f32.mrb[0].mxu0
      %v1460 = vadd.f32 0.0, %v1459
      %v1461 = vpop.f32.mrb[0].mxu0
      %v1462 = vpop.f32.mrb[0].mxu0
      %v1463 = vadd.f32 0.0, %v1462
      %v1464 = vpop.f32.mrb[0].mxu0
      %1465 = vmatprep.mubr.bf16.mxu0 0
      %1466 = vmatmul.mubr.bf16.gmra.mrb[0].mxu0 %v391
      %v1467 = vpop.f32.mrb[0].mxu0
      %v1468 = vadd.f32 0.0, %v1467
      %v1469 = vpop.f32.mrb[0].mxu0
      %v1470 = vpop.f32.mrb[0].mxu0
      %v1471 = vadd.f32 0.0, %v1470
      %v1472 = vpop.f32.mrb[0].mxu0
      %1473 = vmatprep.mubr.bf16.mxu0 0
      %1474 = vmatmul.mubr.bf16.gmra.mrb[0].mxu0 %v394
      %v1475 = vpop.f32.mrb[0].mxu0
      %v1476 = vadd.f32 0.0, %v1475
      %v1477 = vpop.f32.mrb[0].mxu0
      %v1478 = vpop.f32.mrb[0].mxu0
      %v1479 = vadd.f32 0.0, %v1478
      %v1480 = vpop.f32.mrb[0].mxu0
      %1481 = vmatprep.mubr.bf16.mxu0 0
      %1482 = vmatmul.mubr.bf16.gmra.mrb[0].mxu0 %v1423
      %v1483 = vpop.f32.mrb[0].mxu0
      %v1484 = vadd.f32 0.0, %v1483
      %v1485 = vpop.f32.mrb[0].mxu0
      %v1486 = vpop.f32.mrb[0].mxu0
      %v1487 = vadd.f32 0.0, %v1486
      %v1488 = vpop.f32.mrb[0].mxu0
      %1489 = vdwg.mxu0
      %v1490 = vadd.f32 %v1386, %v1460
      %v1491 = vadd.f32 %v1387, %v1463
      %v1492 = vadd.f32 %v1388, %v1468
      %v1493 = vadd.f32 %v1389, %v1471
      %v1494 = vadd.f32 %v1390, %v1476
      %v1495 = vadd.f32 %v1391, %v1479
      %v1496 = vadd.f32 %v1392, %v1484
      %v1497 = vadd.f32 %v1393, %v1487
      %v1498 = vrot.slane %v1395, 5
      %v1499 = vrot.slane %v1498, 4
      %v1500 = vrot.slane %v1396, 5
      %v1501 = vsel %vm550, %v1499, %v1500
      %s1502 = scalar_lea.vmem %s1, 80
      %v1503 = vld [vmem:[%s1502] sm:$0xf]
      %v1504 = vld [vmem:[%s1502 + $0x4] sm:$0xf]
      %v1505 = vunpack.c.l.b16 %v1501
      %v1506 = vpack.c.b16 %v1505, %v1101
      %v1509 = vunpack.c.l.b16 %v1503
      %v1510 = vunpack.c.l.b16 %v1504
      %v1511 = vpack.c.b16 %v1510, %v1509
      %v1514 = vsel %vm383, %v1506, 0
      %1516 = vmatprep.subr.bf16.mxu0 0
      %1517 = vmatpush1.bf16.msra.mxu0 %v1511
      %1518 = vmatprep.subr.bf16.mxu0 0
      %1519 = vmatpush1.bf16.msra.mxu0 0
      %1520 = vmatprep.subr.bf16.mxu0 0
      %1521 = vmatpush1.bf16.msra.mxu0 0
      %1522 = vmatprep.subr.bf16.mxu0 0
      %1523 = vmatpush1.bf16.msra.mxu0 0
      %1524 = vmatprep.subr.bf16.mxu0 0
      %1525 = vmatpush1.bf16.msra.mxu0 0
      %1526 = vmatprep.subr.bf16.mxu0 0
      %1527 = vmatpush1.bf16.msra.mxu0 0
      %1528 = vmatprep.subr.bf16.mxu0 0
      %1529 = vmatpush1.bf16.msra.mxu0 0
      %1530 = vmatprep.subr.bf16.mxu0 0
      %1531 = vmatpush1.bf16.msra.mxu0 0
      %1532 = vmatprep.subr.bf16.mxu0 0
      %1533 = vmatpush1.bf16.msra.mxu0 0
      %1534 = vmatprep.subr.bf16.mxu0 0
      %1535 = vmatpush1.bf16.msra.mxu0 0
      %1536 = vmatprep.subr.bf16.mxu0 0
      %1537 = vmatpush1.bf16.msra.mxu0 0
      %1538 = vmatprep.subr.bf16.mxu0 0
      %1539 = vmatpush1.bf16.msra.mxu0 0
      %1540 = vmatprep.subr.bf16.mxu0 0
      %1541 = vmatpush1.bf16.msra.mxu0 0
      %1542 = vmatprep.subr.bf16.mxu0 0
      %1543 = vmatpush1.bf16.msra.mxu0 0
      %1544 = vmatprep.subr.bf16.mxu0 0
      %1545 = vmatpush1.bf16.msra.mxu0 0
      %1546 = vmatprep.subr.bf16.mxu0 0
      %1547 = vmatpush1.bf16.msra.mxu0 0
      %1548 = vmatprep.mubr.bf16.mxu0 0
      %1549 = vmatmul.mubr.bf16.gmra.mrb[0].mxu0 %v608
      %v1550 = vpop.f32.mrb[0].mxu0
      %v1551 = vadd.f32 0.0, %v1550
      %v1552 = vpop.f32.mrb[0].mxu0
      %v1553 = vpop.f32.mrb[0].mxu0
      %v1554 = vadd.f32 0.0, %v1553
      %v1555 = vpop.f32.mrb[0].mxu0
      %1556 = vmatprep.mubr.bf16.mxu0 0
      %1557 = vmatmul.mubr.bf16.gmra.mrb[0].mxu0 %v611
      %v1558 = vpop.f32.mrb[0].mxu0
      %v1559 = vadd.f32 0.0, %v1558
      %v1560 = vpop.f32.mrb[0].mxu0
      %v1561 = vpop.f32.mrb[0].mxu0
      %v1562 = vadd.f32 0.0, %v1561
      %v1563 = vpop.f32.mrb[0].mxu0
      %1564 = vmatprep.mubr.bf16.mxu0 0
      %1565 = vmatmul.mubr.bf16.gmra.mrb[0].mxu0 %v614
      %v1566 = vpop.f32.mrb[0].mxu0
      %v1567 = vadd.f32 0.0, %v1566
      %v1568 = vpop.f32.mrb[0].mxu0
      %v1569 = vpop.f32.mrb[0].mxu0
      %v1570 = vadd.f32 0.0, %v1569
      %v1571 = vpop.f32.mrb[0].mxu0
      %1572 = vmatprep.mubr.bf16.mxu0 0
      %1573 = vmatmul.mubr.bf16.gmra.mrb[0].mxu0 %v1514
      %v1574 = vpop.f32.mrb[0].mxu0
      %v1575 = vadd.f32 0.0, %v1574
      %v1576 = vpop.f32.mrb[0].mxu0
      %v1577 = vpop.f32.mrb[0].mxu0
      %v1578 = vadd.f32 0.0, %v1577
      %v1579 = vpop.f32.mrb[0].mxu0
      %1580 = vdwg.mxu0
      %v1581 = vadd.f32 %v1490, %v1551
      %v1582 = vadd.f32 %v1491, %v1554
      %v1583 = vadd.f32 %v1492, %v1559
      %v1584 = vadd.f32 %v1493, %v1562
      %v1585 = vadd.f32 %v1494, %v1567
      %v1586 = vadd.f32 %v1495, %v1570
      %v1587 = vadd.f32 %v1496, %v1575
      %v1588 = vadd.f32 %v1497, %v1578
      %v1589 = vrot.slane %v1398, 5
      %v1590 = vrot.slane %v1401, 6
      %v1591 = vor.u32 %v1589, %v1590
      %v1592 = vrot.slane %v1591, 4
      %v1593 = vshrl.u32 %v1396, 16
      %v1595 = vrot.slane %v1593, 5
      %v1596 = vrot.slane %v1407, 6
      %v1597 = vor.u32 %v1595, %v1596
      %v1598 = vsel %vm691, %v1592, %v1597
      %s1599 = scalar_lea.vmem %s1, 88
      %v1600 = vld [vmem:[%s1599] sm:$0xf]
      %v1601 = vld [vmem:[%s1599 + $0x4] sm:$0xf]
      %v1602 = vunpack.c.l.b16 %v1598
      %v1603 = vpack.c.b16 %v1602, %v1210
      %v1606 = vunpack.c.l.b16 %v1600
      %v1607 = vunpack.c.l.b16 %v1601
      %v1608 = vpack.c.b16 %v1607, %v1606
      %v1611 = vsel %vm383, %v1603, 0
      %1613 = vmatprep.subr.bf16.mxu0 0
      %1614 = vmatpush1.bf16.msra.mxu0 %v1608
      %1615 = vmatprep.subr.bf16.mxu0 0
      %1616 = vmatpush1.bf16.msra.mxu0 0
      %1617 = vmatprep.subr.bf16.mxu0 0
      %1618 = vmatpush1.bf16.msra.mxu0 0
      %1619 = vmatprep.subr.bf16.mxu0 0
      %1620 = vmatpush1.bf16.msra.mxu0 0
      %1621 = vmatprep.subr.bf16.mxu0 0
      %1622 = vmatpush1.bf16.msra.mxu0 0
      %1623 = vmatprep.subr.bf16.mxu0 0
      %1624 = vmatpush1.bf16.msra.mxu0 0
      %1625 = vmatprep.subr.bf16.mxu0 0
      %1626 = vmatpush1.bf16.msra.mxu0 0
      %1627 = vmatprep.subr.bf16.mxu0 0
      %1628 = vmatpush1.bf16.msra.mxu0 0
      %1629 = vmatprep.subr.bf16.mxu0 0
      %1630 = vmatpush1.bf16.msra.mxu0 0
      %1631 = vmatprep.subr.bf16.mxu0 0
      %1632 = vmatpush1.bf16.msra.mxu0 0
      %1633 = vmatprep.subr.bf16.mxu0 0
      %1634 = vmatpush1.bf16.msra.mxu0 0
      %1635 = vmatprep.subr.bf16.mxu0 0
      %1636 = vmatpush1.bf16.msra.mxu0 0
      %1637 = vmatprep.subr.bf16.mxu0 0
      %1638 = vmatpush1.bf16.msra.mxu0 0
      %1639 = vmatprep.subr.bf16.mxu0 0
      %1640 = vmatpush1.bf16.msra.mxu0 0
      %1641 = vmatprep.subr.bf16.mxu0 0
      %1642 = vmatpush1.bf16.msra.mxu0 0
      %1643 = vmatprep.subr.bf16.mxu0 0
      %1644 = vmatpush1.bf16.msra.mxu0 0
      %1645 = vmatprep.mubr.bf16.mxu0 0
      %1646 = vmatmul.mubr.bf16.gmra.mrb[0].mxu0 %v797
      %v1647 = vpop.f32.mrb[0].mxu0
      %v1648 = vadd.f32 0.0, %v1647
      %v1649 = vpop.f32.mrb[0].mxu0
      %v1650 = vpop.f32.mrb[0].mxu0
      %v1651 = vadd.f32 0.0, %v1650
      %v1652 = vpop.f32.mrb[0].mxu0
      %1653 = vmatprep.mubr.bf16.mxu0 0
      %1654 = vmatmul.mubr.bf16.gmra.mrb[0].mxu0 %v800
      %v1655 = vpop.f32.mrb[0].mxu0
      %v1656 = vadd.f32 0.0, %v1655
      %v1657 = vpop.f32.mrb[0].mxu0
      %v1658 = vpop.f32.mrb[0].mxu0
      %v1659 = vadd.f32 0.0, %v1658
      %v1660 = vpop.f32.mrb[0].mxu0
      %1661 = vmatprep.mubr.bf16.mxu0 0
      %1662 = vmatmul.mubr.bf16.gmra.mrb[0].mxu0 %v803
      %v1663 = vpop.f32.mrb[0].mxu0
      %v1664 = vadd.f32 0.0, %v1663
      %v1665 = vpop.f32.mrb[0].mxu0
      %v1666 = vpop.f32.mrb[0].mxu0
      %v1667 = vadd.f32 0.0, %v1666
      %v1668 = vpop.f32.mrb[0].mxu0
      %1669 = vmatprep.mubr.bf16.mxu0 0
      %1670 = vmatmul.mubr.bf16.gmra.mrb[0].mxu0 %v1611
      %v1671 = vpop.f32.mrb[0].mxu0
      %v1672 = vadd.f32 0.0, %v1671
      %v1673 = vpop.f32.mrb[0].mxu0
      %v1674 = vpop.f32.mrb[0].mxu0
      %v1675 = vadd.f32 0.0, %v1674
      %v1676 = vpop.f32.mrb[0].mxu0
      %1677 = vdwg.mxu0
      %v1678 = vadd.f32 %v1581, %v1648
      %v1679 = vadd.f32 %v1582, %v1651
      %v1680 = vadd.f32 %v1583, %v1656
      %v1681 = vadd.f32 %v1584, %v1659
      %v1682 = vadd.f32 %v1585, %v1664
      %v1683 = vadd.f32 %v1586, %v1667
      %v1684 = vadd.f32 %v1587, %v1672
      %v1685 = vadd.f32 %v1588, %v1675
      %s1686 = scalar_lea.vmem %s1, 96
      %v1687 = vld [vmem:[%s1686] sm:$0xf]
      %v1688 = vld [vmem:[%s1686 + $0x4] sm:$0xf]
      %v1690 = vunpack.c.l.b16 %v204
      %v1691 = vpack.c.b16 %v1690, %v1310
      %v1694 = vunpack.c.l.b16 %v1687
      %v1695 = vunpack.c.l.b16 %v1688
      %v1696 = vpack.c.b16 %v1695, %v1694
      %v1699 = vsel %vm383, %v1691, 0
      %1701 = vmatprep.subr.bf16.mxu0 0
      %1702 = vmatpush1.bf16.msra.mxu0 %v1696
      %1703 = vmatprep.subr.bf16.mxu0 0
      %1704 = vmatpush1.bf16.msra.mxu0 0
      %1705 = vmatprep.subr.bf16.mxu0 0
      %1706 = vmatpush1.bf16.msra.mxu0 0
      %1707 = vmatprep.subr.bf16.mxu0 0
      %1708 = vmatpush1.bf16.msra.mxu0 0
      %1709 = vmatprep.subr.bf16.mxu0 0
      %1710 = vmatpush1.bf16.msra.mxu0 0
      %1711 = vmatprep.subr.bf16.mxu0 0
      %1712 = vmatpush1.bf16.msra.mxu0 0
      %1713 = vmatprep.subr.bf16.mxu0 0
      %1714 = vmatpush1.bf16.msra.mxu0 0
      %1715 = vmatprep.subr.bf16.mxu0 0
      %1716 = vmatpush1.bf16.msra.mxu0 0
      %1717 = vmatprep.subr.bf16.mxu0 0
      %1718 = vmatpush1.bf16.msra.mxu0 0
      %1719 = vmatprep.subr.bf16.mxu0 0
      %1720 = vmatpush1.bf16.msra.mxu0 0
      %1721 = vmatprep.subr.bf16.mxu0 0
      %1722 = vmatpush1.bf16.msra.mxu0 0
      %1723 = vmatprep.subr.bf16.mxu0 0
      %1724 = vmatpush1.bf16.msra.mxu0 0
      %1725 = vmatprep.subr.bf16.mxu0 0
      %1726 = vmatpush1.bf16.msra.mxu0 0
      %1727 = vmatprep.subr.bf16.mxu0 0
      %1728 = vmatpush1.bf16.msra.mxu0 0
      %1729 = vmatprep.subr.bf16.mxu0 0
      %1730 = vmatpush1.bf16.msra.mxu0 0
      %1731 = vmatprep.subr.bf16.mxu0 0
      %1732 = vmatpush1.bf16.msra.mxu0 0
      %1733 = vmatprep.mubr.bf16.mxu0 0
      %1734 = vmatmul.mubr.bf16.gmra.mrb[0].mxu0 %v897
      %v1735 = vpop.f32.mrb[0].mxu0
      %v1736 = vadd.f32 0.0, %v1735
      %v1737 = vpop.f32.mrb[0].mxu0
      %v1738 = vpop.f32.mrb[0].mxu0
      %v1739 = vadd.f32 0.0, %v1738
      %v1740 = vpop.f32.mrb[0].mxu0
      %1741 = vmatprep.mubr.bf16.mxu0 0
      %1742 = vmatmul.mubr.bf16.gmra.mrb[0].mxu0 %v900
      %v1743 = vpop.f32.mrb[0].mxu0
      %v1744 = vadd.f32 0.0, %v1743
      %v1745 = vpop.f32.mrb[0].mxu0
      %v1746 = vpop.f32.mrb[0].mxu0
      %v1747 = vadd.f32 0.0, %v1746
      %v1748 = vpop.f32.mrb[0].mxu0
      %1749 = vmatprep.mubr.bf16.mxu0 0
      %1750 = vmatmul.mubr.bf16.gmra.mrb[0].mxu0 %v903
      %v1751 = vpop.f32.mrb[0].mxu0
      %v1752 = vadd.f32 0.0, %v1751
      %v1753 = vpop.f32.mrb[0].mxu0
      %v1754 = vpop.f32.mrb[0].mxu0
      %v1755 = vadd.f32 0.0, %v1754
      %v1756 = vpop.f32.mrb[0].mxu0
      %1757 = vmatprep.mubr.bf16.mxu0 0
      %1758 = vmatmul.mubr.bf16.gmra.mrb[0].mxu0 %v1699
      %v1759 = vpop.f32.mrb[0].mxu0
      %v1760 = vadd.f32 0.0, %v1759
      %v1761 = vpop.f32.mrb[0].mxu0
      %v1762 = vpop.f32.mrb[0].mxu0
      %v1763 = vadd.f32 0.0, %v1762
      %v1764 = vpop.f32.mrb[0].mxu0
      %1765 = vdwg.mxu0
      %v1766 = vadd.f32 %v1678, %v1736
      %v1767 = vadd.f32 %v1679, %v1739
      %v1768 = vadd.f32 %v1680, %v1744
      %v1769 = vadd.f32 %v1681, %v1747
      %v1770 = vadd.f32 %v1682, %v1752
      %v1771 = vadd.f32 %v1683, %v1755
      %v1772 = vadd.f32 %v1684, %v1760
      %v1773 = vadd.f32 %v1685, %v1763
      %v1774 = vunpack.c.h.b16 %v204
      %v1775 = vpack.c.b16 %v1690, %v1690
      %v1776 = vpack.c.b16 %v1774, %v1774
      %v1778 = vshrl.u32 %v1775, 16
      %v1780 = vrot.slane %v1778, 4
      %v1781 = vshll.u32 %v1775, 16
      %v1783 = vrot.slane %v1781, 5
      %v1784 = vor.u32 %v1780, %v1783
      %v1785 = vrot.slane %v1784, 4
      %v1787 = vshll.u32 %v1776, 16
      %v1789 = vrot.slane %v1787, 5
      %v1790 = vsel %vm249, %v1785, %v1789
      %s1791 = scalar_lea.vmem %s1, 104
      %v1792 = vld [vmem:[%s1791] sm:$0xf]
      %v1793 = vld [vmem:[%s1791 + $0x4] sm:$0xf]
      %v1794 = vunpack.c.l.b16 %v1790
      %v1795 = vpack.c.b16 %v1794, %v1414
      %v1798 = vunpack.c.l.b16 %v1792
      %v1799 = vunpack.c.l.b16 %v1793
      %v1800 = vpack.c.b16 %v1799, %v1798
      %v1803 = vsel %vm383, %v1795, 0
      %1805 = vmatprep.subr.bf16.mxu0 0
      %1806 = vmatpush1.bf16.msra.mxu0 %v1800
      %1807 = vmatprep.subr.bf16.mxu0 0
      %1808 = vmatpush1.bf16.msra.mxu0 0
      %1809 = vmatprep.subr.bf16.mxu0 0
      %1810 = vmatpush1.bf16.msra.mxu0 0
      %1811 = vmatprep.subr.bf16.mxu0 0
      %1812 = vmatpush1.bf16.msra.mxu0 0
      %1813 = vmatprep.subr.bf16.mxu0 0
      %1814 = vmatpush1.bf16.msra.mxu0 0
      %1815 = vmatprep.subr.bf16.mxu0 0
      %1816 = vmatpush1.bf16.msra.mxu0 0
      %1817 = vmatprep.subr.bf16.mxu0 0
      %1818 = vmatpush1.bf16.msra.mxu0 0
      %1819 = vmatprep.subr.bf16.mxu0 0
      %1820 = vmatpush1.bf16.msra.mxu0 0
      %1821 = vmatprep.subr.bf16.mxu0 0
      %1822 = vmatpush1.bf16.msra.mxu0 0
      %1823 = vmatprep.subr.bf16.mxu0 0
      %1824 = vmatpush1.bf16.msra.mxu0 0
      %1825 = vmatprep.subr.bf16.mxu0 0
      %1826 = vmatpush1.bf16.msra.mxu0 0
      %1827 = vmatprep.subr.bf16.mxu0 0
      %1828 = vmatpush1.bf16.msra.mxu0 0
      %1829 = vmatprep.subr.bf16.mxu0 0
      %1830 = vmatpush1.bf16.msra.mxu0 0
      %1831 = vmatprep.subr.bf16.mxu0 0
      %1832 = vmatpush1.bf16.msra.mxu0 0
      %1833 = vmatprep.subr.bf16.mxu0 0
      %1834 = vmatpush1.bf16.msra.mxu0 0
      %1835 = vmatprep.subr.bf16.mxu0 0
      %1836 = vmatpush1.bf16.msra.mxu0 0
      %1837 = vmatprep.mubr.bf16.mxu0 0
      %1838 = vmatmul.mubr.bf16.gmra.mrb[0].mxu0 %v1013
      %v1839 = vpop.f32.mrb[0].mxu0
      %v1840 = vadd.f32 0.0, %v1839
      %v1841 = vpop.f32.mrb[0].mxu0
      %v1842 = vpop.f32.mrb[0].mxu0
      %v1843 = vadd.f32 0.0, %v1842
      %v1844 = vpop.f32.mrb[0].mxu0
      %1845 = vmatprep.mubr.bf16.mxu0 0
      %1846 = vmatmul.mubr.bf16.gmra.mrb[0].mxu0 %v1016
      %v1847 = vpop.f32.mrb[0].mxu0
      %v1848 = vadd.f32 0.0, %v1847
      %v1849 = vpop.f32.mrb[0].mxu0
      %v1850 = vpop.f32.mrb[0].mxu0
      %v1851 = vadd.f32 0.0, %v1850
      %v1852 = vpop.f32.mrb[0].mxu0
      %1853 = vmatprep.mubr.bf16.mxu0 0
      %1854 = vmatmul.mubr.bf16.gmra.mrb[0].mxu0 %v1019
      %v1855 = vpop.f32.mrb[0].mxu0
      %v1856 = vadd.f32 0.0, %v1855
      %v1857 = vpop.f32.mrb[0].mxu0
      %v1858 = vpop.f32.mrb[0].mxu0
      %v1859 = vadd.f32 0.0, %v1858
      %v1860 = vpop.f32.mrb[0].mxu0
      %1861 = vmatprep.mubr.bf16.mxu0 0
      %1862 = vmatmul.mubr.bf16.gmra.mrb[0].mxu0 %v1803
      %v1863 = vpop.f32.mrb[0].mxu0
      %v1864 = vadd.f32 0.0, %v1863
      %v1865 = vpop.f32.mrb[0].mxu0
      %v1866 = vpop.f32.mrb[0].mxu0
      %v1867 = vadd.f32 0.0, %v1866
      %v1868 = vpop.f32.mrb[0].mxu0
      %1869 = vdwg.mxu0
      %v1870 = vadd.f32 %v1766, %v1840
      %v1871 = vadd.f32 %v1767, %v1843
      %v1872 = vadd.f32 %v1768, %v1848
      %v1873 = vadd.f32 %v1769, %v1851
      %v1874 = vadd.f32 %v1770, %v1856
      %v1875 = vadd.f32 %v1771, %v1859
      %v1876 = vadd.f32 %v1772, %v1864
      %v1877 = vadd.f32 %v1773, %v1867
      %v1878 = vrot.slane %v1775, 5
      %v1879 = vrot.slane %v1878, 4
      %v1880 = vrot.slane %v1776, 5
      %v1881 = vsel %vm550, %v1879, %v1880
      %s1882 = scalar_lea.vmem %s1, 112
      %v1883 = vld [vmem:[%s1882] sm:$0xf]
      %v1884 = vld [vmem:[%s1882 + $0x4] sm:$0xf]
      %v1885 = vunpack.c.l.b16 %v1881
      %v1886 = vpack.c.b16 %v1885, %v1505
      %v1889 = vunpack.c.l.b16 %v1883
      %v1890 = vunpack.c.l.b16 %v1884
      %v1891 = vpack.c.b16 %v1890, %v1889
      %v1894 = vsel %vm383, %v1886, 0
      %1896 = vmatprep.subr.bf16.mxu0 0
      %1897 = vmatpush1.bf16.msra.mxu0 %v1891
      %1898 = vmatprep.subr.bf16.mxu0 0
      %1899 = vmatpush1.bf16.msra.mxu0 0
      %1900 = vmatprep.subr.bf16.mxu0 0
      %1901 = vmatpush1.bf16.msra.mxu0 0
      %1902 = vmatprep.subr.bf16.mxu0 0
      %1903 = vmatpush1.bf16.msra.mxu0 0
      %1904 = vmatprep.subr.bf16.mxu0 0
      %1905 = vmatpush1.bf16.msra.mxu0 0
      %1906 = vmatprep.subr.bf16.mxu0 0
      %1907 = vmatpush1.bf16.msra.mxu0 0
      %1908 = vmatprep.subr.bf16.mxu0 0
      %1909 = vmatpush1.bf16.msra.mxu0 0
      %1910 = vmatprep.subr.bf16.mxu0 0
      %1911 = vmatpush1.bf16.msra.mxu0 0
      %1912 = vmatprep.subr.bf16.mxu0 0
      %1913 = vmatpush1.bf16.msra.mxu0 0
      %1914 = vmatprep.subr.bf16.mxu0 0
      %1915 = vmatpush1.bf16.msra.mxu0 0
      %1916 = vmatprep.subr.bf16.mxu0 0
      %1917 = vmatpush1.bf16.msra.mxu0 0
      %1918 = vmatprep.subr.bf16.mxu0 0
      %1919 = vmatpush1.bf16.msra.mxu0 0
      %1920 = vmatprep.subr.bf16.mxu0 0
      %1921 = vmatpush1.bf16.msra.mxu0 0
      %1922 = vmatprep.subr.bf16.mxu0 0
      %1923 = vmatpush1.bf16.msra.mxu0 0
      %1924 = vmatprep.subr.bf16.mxu0 0
      %1925 = vmatpush1.bf16.msra.mxu0 0
      %1926 = vmatprep.subr.bf16.mxu0 0
      %1927 = vmatpush1.bf16.msra.mxu0 0
      %1928 = vmatprep.mubr.bf16.mxu0 0
      %1929 = vmatmul.mubr.bf16.gmra.mrb[0].mxu0 %v1116
      %v1930 = vpop.f32.mrb[0].mxu0
      %v1931 = vadd.f32 0.0, %v1930
      %v1932 = vpop.f32.mrb[0].mxu0
      %v1933 = vpop.f32.mrb[0].mxu0
      %v1934 = vadd.f32 0.0, %v1933
      %v1935 = vpop.f32.mrb[0].mxu0
      %1936 = vmatprep.mubr.bf16.mxu0 0
      %1937 = vmatmul.mubr.bf16.gmra.mrb[0].mxu0 %v1119
      %v1938 = vpop.f32.mrb[0].mxu0
      %v1939 = vadd.f32 0.0, %v1938
      %v1940 = vpop.f32.mrb[0].mxu0
      %v1941 = vpop.f32.mrb[0].mxu0
      %v1942 = vadd.f32 0.0, %v1941
      %v1943 = vpop.f32.mrb[0].mxu0
      %1944 = vmatprep.mubr.bf16.mxu0 0
      %1945 = vmatmul.mubr.bf16.gmra.mrb[0].mxu0 %v1122
      %v1946 = vpop.f32.mrb[0].mxu0
      %v1947 = vadd.f32 0.0, %v1946
      %v1948 = vpop.f32.mrb[0].mxu0
      %v1949 = vpop.f32.mrb[0].mxu0
      %v1950 = vadd.f32 0.0, %v1949
      %v1951 = vpop.f32.mrb[0].mxu0
      %1952 = vmatprep.mubr.bf16.mxu0 0
      %1953 = vmatmul.mubr.bf16.gmra.mrb[0].mxu0 %v1894
      %v1954 = vpop.f32.mrb[0].mxu0
      %v1955 = vadd.f32 0.0, %v1954
      %v1956 = vpop.f32.mrb[0].mxu0
      %v1957 = vpop.f32.mrb[0].mxu0
      %v1958 = vadd.f32 0.0, %v1957
      %v1959 = vpop.f32.mrb[0].mxu0
      %1960 = vdwg.mxu0
      %v1961 = vadd.f32 %v1870, %v1931
      %v1962 = vadd.f32 %v1871, %v1934
      %v1963 = vadd.f32 %v1872, %v1939
      %v1964 = vadd.f32 %v1873, %v1942
      %v1965 = vadd.f32 %v1874, %v1947
      %v1966 = vadd.f32 %v1875, %v1950
      %v1967 = vadd.f32 %v1876, %v1955
      %v1968 = vadd.f32 %v1877, %v1958
      %v1969 = vrot.slane %v1778, 5
      %v1970 = vrot.slane %v1781, 6
      %v1971 = vor.u32 %v1969, %v1970
      %v1972 = vrot.slane %v1971, 4
      %v1973 = vshrl.u32 %v1776, 16
      %v1975 = vrot.slane %v1973, 5
      %v1976 = vrot.slane %v1787, 6
      %v1977 = vor.u32 %v1975, %v1976
      %v1978 = vsel %vm691, %v1972, %v1977
      %s1979 = scalar_lea.vmem %s1, 120
      %v1980 = vld [vmem:[%s1979] sm:$0xf]
      %v1981 = vld [vmem:[%s1979 + $0x4] sm:$0xf]
      %v1982 = vunpack.c.l.b16 %v1978
      %v1983 = vpack.c.b16 %v1982, %v1602
      %v1986 = vunpack.c.l.b16 %v1980
      %v1987 = vunpack.c.l.b16 %v1981
      %v1988 = vpack.c.b16 %v1987, %v1986
      %v1991 = vsel %vm383, %v1983, 0
      %1993 = vmatprep.subr.bf16.mxu0 0
      %1994 = vmatpush1.bf16.msra.mxu0 %v1988
      %1995 = vmatprep.subr.bf16.mxu0 0
      %1996 = vmatpush1.bf16.msra.mxu0 0
      %1997 = vmatprep.subr.bf16.mxu0 0
      %1998 = vmatpush1.bf16.msra.mxu0 0
      %1999 = vmatprep.subr.bf16.mxu0 0
      %2000 = vmatpush1.bf16.msra.mxu0 0
      %2001 = vmatprep.subr.bf16.mxu0 0
      %2002 = vmatpush1.bf16.msra.mxu0 0
      %2003 = vmatprep.subr.bf16.mxu0 0
      %2004 = vmatpush1.bf16.msra.mxu0 0
      %2005 = vmatprep.subr.bf16.mxu0 0
      %2006 = vmatpush1.bf16.msra.mxu0 0
      %2007 = vmatprep.subr.bf16.mxu0 0
      %2008 = vmatpush1.bf16.msra.mxu0 0
      %2009 = vmatprep.subr.bf16.mxu0 0
      %2010 = vmatpush1.bf16.msra.mxu0 0
      %2011 = vmatprep.subr.bf16.mxu0 0
      %2012 = vmatpush1.bf16.msra.mxu0 0
      %2013 = vmatprep.subr.bf16.mxu0 0
      %2014 = vmatpush1.bf16.msra.mxu0 0
      %2015 = vmatprep.subr.bf16.mxu0 0
      %2016 = vmatpush1.bf16.msra.mxu0 0
      %2017 = vmatprep.subr.bf16.mxu0 0
      %2018 = vmatpush1.bf16.msra.mxu0 0
      %2019 = vmatprep.subr.bf16.mxu0 0
      %2020 = vmatpush1.bf16.msra.mxu0 0
      %2021 = vmatprep.subr.bf16.mxu0 0
      %2022 = vmatpush1.bf16.msra.mxu0 0
      %2023 = vmatprep.subr.bf16.mxu0 0
      %2024 = vmatpush1.bf16.msra.mxu0 0
      %2025 = vmatprep.mubr.bf16.mxu0 0
      %2026 = vmatmul.mubr.bf16.gmra.mrb[0].mxu0 %v1225
      %v2027 = vpop.f32.mrb[0].mxu0
      %v2028 = vadd.f32 0.0, %v2027
      %v2029 = vpop.f32.mrb[0].mxu0
      %v2030 = vpop.f32.mrb[0].mxu0
      %v2031 = vadd.f32 0.0, %v2030
      %v2032 = vpop.f32.mrb[0].mxu0
      %2033 = vmatprep.mubr.bf16.mxu0 0
      %2034 = vmatmul.mubr.bf16.gmra.mrb[0].mxu0 %v1228
      %v2035 = vpop.f32.mrb[0].mxu0
      %v2036 = vadd.f32 0.0, %v2035
      %v2037 = vpop.f32.mrb[0].mxu0
      %v2038 = vpop.f32.mrb[0].mxu0
      %v2039 = vadd.f32 0.0, %v2038
      %v2040 = vpop.f32.mrb[0].mxu0
      %2041 = vmatprep.mubr.bf16.mxu0 0
      %2042 = vmatmul.mubr.bf16.gmra.mrb[0].mxu0 %v1231
      %v2043 = vpop.f32.mrb[0].mxu0
      %v2044 = vadd.f32 0.0, %v2043
      %v2045 = vpop.f32.mrb[0].mxu0
      %v2046 = vpop.f32.mrb[0].mxu0
      %v2047 = vadd.f32 0.0, %v2046
      %v2048 = vpop.f32.mrb[0].mxu0
      %2049 = vmatprep.mubr.bf16.mxu0 0
      %2050 = vmatmul.mubr.bf16.gmra.mrb[0].mxu0 %v1991
      %v2051 = vpop.f32.mrb[0].mxu0
      %v2052 = vadd.f32 0.0, %v2051
      %v2053 = vpop.f32.mrb[0].mxu0
      %v2054 = vpop.f32.mrb[0].mxu0
      %v2055 = vadd.f32 0.0, %v2054
      %v2056 = vpop.f32.mrb[0].mxu0
      %2057 = vdwg.mxu0
      %v2058 = vadd.f32 %v1961, %v2028
      %v2059 = vadd.f32 %v1962, %v2031
      %v2060 = vadd.f32 %v1963, %v2036
      %v2061 = vadd.f32 %v1964, %v2039
      %v2062 = vadd.f32 %v1965, %v2044
      %v2063 = vadd.f32 %v1966, %v2047
      %v2064 = vadd.f32 %v1967, %v2052
      %v2065 = vadd.f32 %v1968, %v2055
      %v2066 = vld [vmem:[%s2] sm:$0x1]
      %v2068 = vlaneseq
      %v2069 = vshrl.u32 %v2068, 7
      %v2070 = vsub.s32 0, %v2069
      %v2071 = vrot.slane %v2066, %v2070
      %v2073 = vadd.f32 %v2058, %v2071
      %v2074 = vadd.f32 %v2059, %v2071
      %v2075 = vadd.f32 %v2060, %v2071
      %v2076 = vadd.f32 %v2061, %v2071
      %v2077 = vadd.f32 %v2062, %v2071
      %v2078 = vadd.f32 %v2063, %v2071
      %v2079 = vadd.f32 %v2064, %v2071
      %v2080 = vadd.f32 %v2065, %v2071
      %v2081 = vxor.u32 %v2073, 2147483648
      %v2082 = vxor.u32 %v2074, 2147483648
      %v2083 = vxor.u32 %v2075, 2147483648
      %v2084 = vxor.u32 %v2076, 2147483648
      %v2085 = vxor.u32 %v2077, 2147483648
      %v2086 = vxor.u32 %v2078, 2147483648
      %v2087 = vxor.u32 %v2079, 2147483648
      %v2088 = vxor.u32 %v2080, 2147483648
      %v2089 = vmul.f32 %v2081, 1.442695
      %v2090 = vpow.pop %v2089
      %v2091 = vmul.f32 %v2082, 1.442695
      %v2092 = vpow.pop %v2091
      %v2093 = vmul.f32 %v2083, 1.442695
      %v2094 = vpow.pop %v2093
      %v2095 = vmul.f32 %v2084, 1.442695
      %v2096 = vpow.pop %v2095
      %v2097 = vmul.f32 %v2085, 1.442695
      %v2098 = vpow.pop %v2097
      %v2099 = vmul.f32 %v2086, 1.442695
      %v2100 = vpow.pop %v2099
      %v2101 = vmul.f32 %v2087, 1.442695
      %v2102 = vpow.pop %v2101
      %v2103 = vmul.f32 %v2088, 1.442695
      %v2104 = vpow.pop %v2103
      %v2105 = vadd.f32 %v2090, 1.0
      %v2106 = vadd.f32 %v2092, 1.0
      %v2107 = vadd.f32 %v2094, 1.0
      %v2108 = vadd.f32 %v2096, 1.0
      %v2109 = vadd.f32 %v2098, 1.0
      %v2110 = vadd.f32 %v2100, 1.0
      %v2111 = vadd.f32 %v2102, 1.0
      %v2112 = vadd.f32 %v2104, 1.0
      %v2113 = vrcp.pop %v2105
      %v2114 = vmul.f32 1.0, %v2113
      %v2115 = vrcp.pop %v2106
      %v2116 = vmul.f32 1.0, %v2115
      %v2117 = vrcp.pop %v2107
      %v2118 = vmul.f32 1.0, %v2117
      %v2119 = vrcp.pop %v2108
      %v2120 = vmul.f32 1.0, %v2119
      %v2121 = vrcp.pop %v2109
      %v2122 = vmul.f32 1.0, %v2121
      %v2123 = vrcp.pop %v2110
      %v2124 = vmul.f32 1.0, %v2123
      %v2125 = vrcp.pop %v2111
      %v2126 = vmul.f32 1.0, %v2125
      %v2127 = vrcp.pop %v2112
      %v2128 = vmul.f32 1.0, %v2127
      %v2129 = vmul.f32 %v2073, %v2114
      %v2130 = vmul.f32 %v2074, %v2116
      %v2131 = vmul.f32 %v2075, %v2118
      %v2132 = vmul.f32 %v2076, %v2120
      %v2133 = vmul.f32 %v2077, %v2122
      %v2134 = vmul.f32 %v2078, %v2124
      %v2135 = vmul.f32 %v2079, %v2126
      %v2136 = vmul.f32 %v2080, %v2128
      %vm2137 = vcmask 261120
      %2138 = vst.msk [vmem:[%s170] sm:$0xff] %vm2137, %v2129
      %2139 = vst.msk [vmem:[%s170 + $0x8] sm:$0xff] %vm2137, %v2130
      %2140 = vst.msk [vmem:[%s170 + $0x10] sm:$0xff] %vm2137, %v2131
      %2141 = vst.msk [vmem:[%s170 + $0x18] sm:$0xff] %vm2137, %v2132
      %2142 = vst.msk [vmem:[%s170 + $0x20] sm:$0xff] %vm2137, %v2133
      %2143 = vst.msk [vmem:[%s170 + $0x28] sm:$0xff] %vm2137, %v2134
      %2144 = vst.msk [vmem:[%s170 + $0x30] sm:$0xff] %vm2137, %v2135
      %2145 = vst.msk [vmem:[%s170 + $0x38] sm:$0xff] %vm2137, %v2136
      %p2146 = scmp.lt.s32.totalorder %s14, 1
      %s2147 = scalar_select %p2146, %s14, 1
      %s2148 = smul.addr %s2147, 8
      %s2149 = smul.addr %s2148, 8
      %s2150 = scalar_lea.vmem %s3, %s2149
      // Predicated region
      $region33: #{tpu_custom_call.1} parent=31 // pred_check
        %p2151 = pneg %p100
      $region34: #{tpu_custom_call.1} parent=31 // pred_check_branch
        %2153 = sbr.rel (%p2151) target = $region36
      $region35: #{tpu_custom_call.1} parent=31 // pred_region
        _
      $region36: #{tpu_custom_call.1} parent=31 // pred_fallthru
        _
    $region32: #{tpu_custom_call.1} parent=5 // pred_fallthru
      _
    %p2154 = scmp.le.s32.totalorder 2, %s9
    // Predicated region
    $region37: #{tpu_custom_call.1} parent=5 // pred_check
      %p2155 = pneg %p2154
    $region38: #{tpu_custom_call.1} parent=5 // pred_check_branch
      %2157 = sbr.rel (%p2155) target = $region40
    $region39: #{tpu_custom_call.1} parent=5 // pred_region
      %s2158 = ssub.s32 %s9, 2
      // Predicated region
      $region41: #{tpu_custom_call.1} parent=39 // pred_check
        %p2159 = pneg %p106
      $region42: #{tpu_custom_call.1} parent=39 // pred_check_branch
        %2161 = sbr.rel (%p2159) target = $region44
      $region43: #{tpu_custom_call.1} parent=39 // pred_region
        %p2162 = scmp.lt.s32.totalorder %s15, 1
        %s2163 = scalar_select %p2162, %s15, 1
        %s2164 = smul.addr %s2163, 8
        %s2165 = smul.addr %s2164, 8
        %s2166 = scalar_lea.vmem %s3, %s2165
      $region44: #{tpu_custom_call.1} parent=39 // pred_fallthru
        _
    $region40: #{tpu_custom_call.1} parent=5 // pred_fallthru
      _
  $region6: #{tpu_custom_call.1} parent=0 // loop_footer
    %s13 = sadd.s32 1, %s9
  $region7: #{tpu_custom_call.1} parent=0 // loop_footer_branch
    %8 = sbr.rel target = $region3
  $region8: #{tpu_custom_call.1} parent=0 // loop_exit
    _

</llo_original>
